<compile_context>
chip_gen: v7x
topology: tpu7x:2x2x1
jax: 0.10.0
libtpu: 0.0.40
codegen_flags: <defaults>
</compile_context>

<pallas_src>
import functools

import jax
import jax.numpy as jnp
from jax import lax
from jax.experimental import pallas as pl
from jax.experimental.pallas import tpu as pltpu


def _round_up(x, m):
    return ((x + m - 1) // m) * m


# ----------------------------- Pallas kernel ------------------------------ #
def _pruned_conv_kernel(x_ref, w_ref, m_ref, b_ref, bm_ref, o_ref, *, kh, kw, wp):
    """Masked KHxKW conv as kh*kw shifted MXU dots over a lane-flattened plane.

    x_ref  : (C, N*slab + slack)  zero-padded activation; one slab-long
                                  lane-dense segment per batch image
    w_ref  : (kh*kw, OC, C)       conv weight, tap-major
    m_ref  : (kh*kw, OC, C)       weight_mask, same layout
    b_ref  : (OC, 1)              bias
    bm_ref : (OC, 1)              bias_mask
    o_ref  : (OC, N*slab)         output planes in padded-grid coordinates
    """
    n_lanes = o_ref.shape[1]
    acc = jnp.zeros(o_ref.shape, jnp.float32)
    k = 0
    for i in range(kh):
        for j in range(kw):
            shift = i * wp + j
            w_k = w_ref[k] * m_ref[k]                 # weight.mul_(weight_mask)
            x_k = x_ref[:, shift:shift + n_lanes]     # on-chip shifted view
            acc = acc + jnp.dot(w_k, x_k, preferred_element_type=jnp.float32)
            k += 1
    acc = acc + b_ref[...] * bm_ref[...]              # bias.mul_(bias_mask) + add
    o_ref[...] = acc.astype(o_ref.dtype)


# ------------------------------- JAX glue --------------------------------- #
@functools.partial(jax.jit, static_argnames=("padding",))
def pruner_wrapped_conv2d(x, weight, bias, weight_mask, bias_mask, *, padding=1):
    """Forward of PrunerModuleWrapper(Conv2d). x: NCHW -> NCHW."""
    N, C, H, W = x.shape
    OC, _, KH, KW = weight.shape
    Hp, Wp = H + 2 * padding, W + 2 * padding
    Lp = Hp * Wp
    slab = _round_up(Lp, 128)                       # lane-dense per-image segment
    slack = _round_up((KH - 1) * Wp + KW, 128)      # so the largest shift stays in-bounds
    n_lanes = N * slab

    # Activation: spatial zero-pad, channels -> sublane axis, each image's
    # padded plane flattened into a slab-long lane-dense segment.
    xp = jnp.pad(x, ((0, 0), (0, 0), (padding, padding), (padding, padding)))
    xf = xp.transpose(1, 0, 2, 3).reshape(C, N, Lp)
    xf = jnp.pad(xf, ((0, 0), (0, 0), (0, slab - Lp))).reshape(C, n_lanes)
    xf = jnp.pad(xf, ((0, 0), (0, slack)))          # (C, N*slab + slack)

    # Weight / mask tap-major so the kernel indexes one (OC, C) slab per tap;
    # masking commutes with the (identical) re-layout of weight and mask.
    w9 = weight.transpose(2, 3, 0, 1).reshape(KH * KW, OC, C)
    m9 = weight_mask.transpose(2, 3, 0, 1).reshape(KH * KW, OC, C)
    b2 = bias.reshape(OC, 1)
    bm2 = bias_mask.reshape(OC, 1)

    vmem = functools.partial(pl.BlockSpec, memory_space=pltpu.MemorySpace.VMEM)
    out = pl.pallas_call(
        functools.partial(_pruned_conv_kernel, kh=KH, kw=KW, wp=Wp),
        out_shape=jax.ShapeDtypeStruct((OC, n_lanes), x.dtype),
        in_specs=[vmem(), vmem(), vmem(), vmem(), vmem()],
        out_specs=vmem(),
    )(xf, w9, m9, b2, bm2)

    # Padded-grid coords -> NCHW: valid outputs are rows/cols [0,H)/[0,W) of
    # each image's (Hp, Wp) plane; then a leading-dims-only transpose.
    y = out.reshape(OC, N, slab)[:, :, :Lp].reshape(OC, N, Hp, Wp)[:, :, :H, :W]
    return y.transpose(1, 0, 2, 3)


# ----------------------------- reference check ---------------------------- #
def _reference(x, weight, bias, weight_mask, bias_mask, padding=1):
    w = weight * weight_mask
    b = bias * bias_mask
    y = lax.conv_general_dilated(
        x, w, window_strides=(1, 1), padding=((padding, padding),) * 2,
        dimension_numbers=("NCHW", "OIHW", "NCHW"))
    return y + b.reshape(1, -1, 1, 1)


if __name__ == "__main__":
    key = jax.random.PRNGKey(0)
    kx, kw_, kb = jax.random.split(key, 3)

    N, C, H, W = 2, 4, 16, 16
    OC, KH, KW = 8, 3, 3

    x = jax.random.normal(kx, (N, C, H, W), dtype=jnp.float32)
    weight = jax.random.normal(kw_, (OC, C, KH, KW), dtype=jnp.float32) * 0.1
    bias = jax.random.normal(kb, (OC,), dtype=jnp.float32) * 0.1

    # Buffers registered in __init__ are ones; simulate a pruner having zeroed
    # two output channels (forward semantics are mask-value agnostic).
    weight_mask = jnp.ones((OC, C, KH, KW), dtype=jnp.float32)
    weight_mask = weight_mask.at[0].set(0.0).at[3].set(0.0)
    bias_mask = jnp.ones((OC,), dtype=jnp.float32)
    bias_mask = bias_mask.at[0].set(0.0).at[3].set(0.0)

    out = pruner_wrapped_conv2d(x, weight, bias, weight_mask, bias_mask)
    out = jax.block_until_ready(out)

    ref = _reference(x, weight, bias, weight_mask, bias_mask)
    assert out.shape == (N, OC, H, W), out.shape
    assert jnp.allclose(out, ref, atol=1e-4, rtol=1e-4), "mismatch vs reference conv"

    print("KERNEL_OK")
</pallas_src>

<mosaic_0001>
module attributes {stable_mosaic.version = 11 : i64} {
  func.func @_pruned_conv_kernel(%arg0: memref<4x896xf32, #tpu.memory_space<vmem>>, %arg1: memref<9x8x4xf32, #tpu.memory_space<vmem>>, %arg2: memref<9x8x4xf32, #tpu.memory_space<vmem>>, %arg3: memref<8x1xf32, #tpu.memory_space<vmem>>, %arg4: memref<8x1xf32, #tpu.memory_space<vmem>>, %arg5: memref<8x768xf32, #tpu.memory_space<vmem>>) attributes {dimension_semantics = [], scalar_prefetch = 0 : i64, scratch_operands = 0 : i64, tpu.core_type = #tpu.core_type<tc>} {
    %cst = arith.constant 0.000000e+00 : f32
    %0 = vector.broadcast %cst : f32 to vector<8x768xf32>
    %c0 = arith.constant 0 : index
    %c0_0 = arith.constant 0 : index
    %c0_1 = arith.constant 0 : index
    %1 = vector.load %arg1[%c0, %c0_0, %c0_1] : memref<9x8x4xf32, #tpu.memory_space<vmem>>, vector<1x8x4xf32>
    %2 = vector.shape_cast %1 : vector<1x8x4xf32> to vector<8x4xf32>
    %c0_2 = arith.constant 0 : index
    %c0_3 = arith.constant 0 : index
    %c0_4 = arith.constant 0 : index
    %3 = vector.load %arg2[%c0_2, %c0_3, %c0_4] : memref<9x8x4xf32, #tpu.memory_space<vmem>>, vector<1x8x4xf32>
    %4 = vector.shape_cast %3 : vector<1x8x4xf32> to vector<8x4xf32>
    %5 = arith.mulf %2, %4 : vector<8x4xf32>
    %c0_5 = arith.constant 0 : index
    %c0_6 = arith.constant 0 : index
    %6 = vector.load %arg0[%c0_5, %c0_6] : memref<4x896xf32, #tpu.memory_space<vmem>>, vector<4x768xf32>
    %cst_7 = arith.constant dense<0.000000e+00> : vector<8x768xf32>
    %7 = tpu.matmul %5, %6, %cst_7 {dimension_numbers = #tpu.dot_dimension_numbers<[1], [0], [0], [1], [0, 0, 1, 1], [], []>} : vector<8x4xf32>, vector<4x768xf32>, vector<8x768xf32> -> vector<8x768xf32>
    %8 = arith.addf %0, %7 : vector<8x768xf32>
    %c1 = arith.constant 1 : index
    %c0_8 = arith.constant 0 : index
    %c0_9 = arith.constant 0 : index
    %9 = vector.load %arg1[%c1, %c0_8, %c0_9] : memref<9x8x4xf32, #tpu.memory_space<vmem>>, vector<1x8x4xf32>
    %10 = vector.shape_cast %9 : vector<1x8x4xf32> to vector<8x4xf32>
    %c1_10 = arith.constant 1 : index
    %c0_11 = arith.constant 0 : index
    %c0_12 = arith.constant 0 : index
    %11 = vector.load %arg2[%c1_10, %c0_11, %c0_12] : memref<9x8x4xf32, #tpu.memory_space<vmem>>, vector<1x8x4xf32>
    %12 = vector.shape_cast %11 : vector<1x8x4xf32> to vector<8x4xf32>
    %13 = arith.mulf %10, %12 : vector<8x4xf32>
    %c0_13 = arith.constant 0 : index
    %c1_14 = arith.constant 1 : index
    %14 = vector.load %arg0[%c0_13, %c1_14] : memref<4x896xf32, #tpu.memory_space<vmem>>, vector<4x768xf32>
    %cst_15 = arith.constant dense<0.000000e+00> : vector<8x768xf32>
    %15 = tpu.matmul %13, %14, %cst_15 {dimension_numbers = #tpu.dot_dimension_numbers<[1], [0], [0], [1], [0, 0, 1, 1], [], []>} : vector<8x4xf32>, vector<4x768xf32>, vector<8x768xf32> -> vector<8x768xf32>
    %16 = arith.addf %8, %15 : vector<8x768xf32>
    %c2 = arith.constant 2 : index
    %c0_16 = arith.constant 0 : index
    %c0_17 = arith.constant 0 : index
    %17 = vector.load %arg1[%c2, %c0_16, %c0_17] : memref<9x8x4xf32, #tpu.memory_space<vmem>>, vector<1x8x4xf32>
    %18 = vector.shape_cast %17 : vector<1x8x4xf32> to vector<8x4xf32>
    %c2_18 = arith.constant 2 : index
    %c0_19 = arith.constant 0 : index
    %c0_20 = arith.constant 0 : index
    %19 = vector.load %arg2[%c2_18, %c0_19, %c0_20] : memref<9x8x4xf32, #tpu.memory_space<vmem>>, vector<1x8x4xf32>
    %20 = vector.shape_cast %19 : vector<1x8x4xf32> to vector<8x4xf32>
    %21 = arith.mulf %18, %20 : vector<8x4xf32>
    %c0_21 = arith.constant 0 : index
    %c2_22 = arith.constant 2 : index
    %22 = vector.load %arg0[%c0_21, %c2_22] : memref<4x896xf32, #tpu.memory_space<vmem>>, vector<4x768xf32>
    %cst_23 = arith.constant dense<0.000000e+00> : vector<8x768xf32>
    %23 = tpu.matmul %21, %22, %cst_23 {dimension_numbers = #tpu.dot_dimension_numbers<[1], [0], [0], [1], [0, 0, 1, 1], [], []>} : vector<8x4xf32>, vector<4x768xf32>, vector<8x768xf32> -> vector<8x768xf32>
    %24 = arith.addf %16, %23 : vector<8x768xf32>
    %c3 = arith.constant 3 : index
    %c0_24 = arith.constant 0 : index
    %c0_25 = arith.constant 0 : index
    %25 = vector.load %arg1[%c3, %c0_24, %c0_25] : memref<9x8x4xf32, #tpu.memory_space<vmem>>, vector<1x8x4xf32>
    %26 = vector.shape_cast %25 : vector<1x8x4xf32> to vector<8x4xf32>
    %c3_26 = arith.constant 3 : index
    %c0_27 = arith.constant 0 : index
    %c0_28 = arith.constant 0 : index
    %27 = vector.load %arg2[%c3_26, %c0_27, %c0_28] : memref<9x8x4xf32, #tpu.memory_space<vmem>>, vector<1x8x4xf32>
    %28 = vector.shape_cast %27 : vector<1x8x4xf32> to vector<8x4xf32>
    %29 = arith.mulf %26, %28 : vector<8x4xf32>
    %c0_29 = arith.constant 0 : index
    %c18 = arith.constant 18 : index
    %30 = vector.load %arg0[%c0_29, %c18] : memref<4x896xf32, #tpu.memory_space<vmem>>, vector<4x768xf32>
    %cst_30 = arith.constant dense<0.000000e+00> : vector<8x768xf32>
    %31 = tpu.matmul %29, %30, %cst_30 {dimension_numbers = #tpu.dot_dimension_numbers<[1], [0], [0], [1], [0, 0, 1, 1], [], []>} : vector<8x4xf32>, vector<4x768xf32>, vector<8x768xf32> -> vector<8x768xf32>
    %32 = arith.addf %24, %31 : vector<8x768xf32>
    %c4 = arith.constant 4 : index
    %c0_31 = arith.constant 0 : index
    %c0_32 = arith.constant 0 : index
    %33 = vector.load %arg1[%c4, %c0_31, %c0_32] : memref<9x8x4xf32, #tpu.memory_space<vmem>>, vector<1x8x4xf32>
    %34 = vector.shape_cast %33 : vector<1x8x4xf32> to vector<8x4xf32>
    %c4_33 = arith.constant 4 : index
    %c0_34 = arith.constant 0 : index
    %c0_35 = arith.constant 0 : index
    %35 = vector.load %arg2[%c4_33, %c0_34, %c0_35] : memref<9x8x4xf32, #tpu.memory_space<vmem>>, vector<1x8x4xf32>
    %36 = vector.shape_cast %35 : vector<1x8x4xf32> to vector<8x4xf32>
    %37 = arith.mulf %34, %36 : vector<8x4xf32>
    %c0_36 = arith.constant 0 : index
    %c19 = arith.constant 19 : index
    %38 = vector.load %arg0[%c0_36, %c19] : memref<4x896xf32, #tpu.memory_space<vmem>>, vector<4x768xf32>
    %cst_37 = arith.constant dense<0.000000e+00> : vector<8x768xf32>
    %39 = tpu.matmul %37, %38, %cst_37 {dimension_numbers = #tpu.dot_dimension_numbers<[1], [0], [0], [1], [0, 0, 1, 1], [], []>} : vector<8x4xf32>, vector<4x768xf32>, vector<8x768xf32> -> vector<8x768xf32>
    %40 = arith.addf %32, %39 : vector<8x768xf32>
    %c5 = arith.constant 5 : index
    %c0_38 = arith.constant 0 : index
    %c0_39 = arith.constant 0 : index
    %41 = vector.load %arg1[%c5, %c0_38, %c0_39] : memref<9x8x4xf32, #tpu.memory_space<vmem>>, vector<1x8x4xf32>
    %42 = vector.shape_cast %41 : vector<1x8x4xf32> to vector<8x4xf32>
    %c5_40 = arith.constant 5 : index
    %c0_41 = arith.constant 0 : index
    %c0_42 = arith.constant 0 : index
    %43 = vector.load %arg2[%c5_40, %c0_41, %c0_42] : memref<9x8x4xf32, #tpu.memory_space<vmem>>, vector<1x8x4xf32>
    %44 = vector.shape_cast %43 : vector<1x8x4xf32> to vector<8x4xf32>
    %45 = arith.mulf %42, %44 : vector<8x4xf32>
    %c0_43 = arith.constant 0 : index
    %c20 = arith.constant 20 : index
    %46 = vector.load %arg0[%c0_43, %c20] : memref<4x896xf32, #tpu.memory_space<vmem>>, vector<4x768xf32>
    %cst_44 = arith.constant dense<0.000000e+00> : vector<8x768xf32>
    %47 = tpu.matmul %45, %46, %cst_44 {dimension_numbers = #tpu.dot_dimension_numbers<[1], [0], [0], [1], [0, 0, 1, 1], [], []>} : vector<8x4xf32>, vector<4x768xf32>, vector<8x768xf32> -> vector<8x768xf32>
    %48 = arith.addf %40, %47 : vector<8x768xf32>
    %c6 = arith.constant 6 : index
    %c0_45 = arith.constant 0 : index
    %c0_46 = arith.constant 0 : index
    %49 = vector.load %arg1[%c6, %c0_45, %c0_46] : memref<9x8x4xf32, #tpu.memory_space<vmem>>, vector<1x8x4xf32>
    %50 = vector.shape_cast %49 : vector<1x8x4xf32> to vector<8x4xf32>
    %c6_47 = arith.constant 6 : index
    %c0_48 = arith.constant 0 : index
    %c0_49 = arith.constant 0 : index
    %51 = vector.load %arg2[%c6_47, %c0_48, %c0_49] : memref<9x8x4xf32, #tpu.memory_space<vmem>>, vector<1x8x4xf32>
    %52 = vector.shape_cast %51 : vector<1x8x4xf32> to vector<8x4xf32>
    %53 = arith.mulf %50, %52 : vector<8x4xf32>
    %c0_50 = arith.constant 0 : index
    %c36 = arith.constant 36 : index
    %54 = vector.load %arg0[%c0_50, %c36] : memref<4x896xf32, #tpu.memory_space<vmem>>, vector<4x768xf32>
    %cst_51 = arith.constant dense<0.000000e+00> : vector<8x768xf32>
    %55 = tpu.matmul %53, %54, %cst_51 {dimension_numbers = #tpu.dot_dimension_numbers<[1], [0], [0], [1], [0, 0, 1, 1], [], []>} : vector<8x4xf32>, vector<4x768xf32>, vector<8x768xf32> -> vector<8x768xf32>
    %56 = arith.addf %48, %55 : vector<8x768xf32>
    %c7 = arith.constant 7 : index
    %c0_52 = arith.constant 0 : index
    %c0_53 = arith.constant 0 : index
    %57 = vector.load %arg1[%c7, %c0_52, %c0_53] : memref<9x8x4xf32, #tpu.memory_space<vmem>>, vector<1x8x4xf32>
    %58 = vector.shape_cast %57 : vector<1x8x4xf32> to vector<8x4xf32>
    %c7_54 = arith.constant 7 : index
    %c0_55 = arith.constant 0 : index
    %c0_56 = arith.constant 0 : index
    %59 = vector.load %arg2[%c7_54, %c0_55, %c0_56] : memref<9x8x4xf32, #tpu.memory_space<vmem>>, vector<1x8x4xf32>
    %60 = vector.shape_cast %59 : vector<1x8x4xf32> to vector<8x4xf32>
    %61 = arith.mulf %58, %60 : vector<8x4xf32>
    %c0_57 = arith.constant 0 : index
    %c37 = arith.constant 37 : index
    %62 = vector.load %arg0[%c0_57, %c37] : memref<4x896xf32, #tpu.memory_space<vmem>>, vector<4x768xf32>
    %cst_58 = arith.constant dense<0.000000e+00> : vector<8x768xf32>
    %63 = tpu.matmul %61, %62, %cst_58 {dimension_numbers = #tpu.dot_dimension_numbers<[1], [0], [0], [1], [0, 0, 1, 1], [], []>} : vector<8x4xf32>, vector<4x768xf32>, vector<8x768xf32> -> vector<8x768xf32>
    %64 = arith.addf %56, %63 : vector<8x768xf32>
    %c8 = arith.constant 8 : index
    %c0_59 = arith.constant 0 : index
    %c0_60 = arith.constant 0 : index
    %65 = vector.load %arg1[%c8, %c0_59, %c0_60] : memref<9x8x4xf32, #tpu.memory_space<vmem>>, vector<1x8x4xf32>
    %66 = vector.shape_cast %65 : vector<1x8x4xf32> to vector<8x4xf32>
    %c8_61 = arith.constant 8 : index
    %c0_62 = arith.constant 0 : index
    %c0_63 = arith.constant 0 : index
    %67 = vector.load %arg2[%c8_61, %c0_62, %c0_63] : memref<9x8x4xf32, #tpu.memory_space<vmem>>, vector<1x8x4xf32>
    %68 = vector.shape_cast %67 : vector<1x8x4xf32> to vector<8x4xf32>
    %69 = arith.mulf %66, %68 : vector<8x4xf32>
    %c0_64 = arith.constant 0 : index
    %c38 = arith.constant 38 : index
    %70 = vector.load %arg0[%c0_64, %c38] : memref<4x896xf32, #tpu.memory_space<vmem>>, vector<4x768xf32>
    %cst_65 = arith.constant dense<0.000000e+00> : vector<8x768xf32>
    %71 = tpu.matmul %69, %70, %cst_65 {dimension_numbers = #tpu.dot_dimension_numbers<[1], [0], [0], [1], [0, 0, 1, 1], [], []>} : vector<8x4xf32>, vector<4x768xf32>, vector<8x768xf32> -> vector<8x768xf32>
    %72 = arith.addf %64, %71 : vector<8x768xf32>
    %c0_66 = arith.constant 0 : index
    %c0_67 = arith.constant 0 : index
    %73 = vector.load %arg3[%c0_66, %c0_67] : memref<8x1xf32, #tpu.memory_space<vmem>>, vector<8x1xf32>
    %c0_68 = arith.constant 0 : index
    %c0_69 = arith.constant 0 : index
    %74 = vector.load %arg4[%c0_68, %c0_69] : memref<8x1xf32, #tpu.memory_space<vmem>>, vector<8x1xf32>
    %75 = arith.mulf %73, %74 : vector<8x1xf32>
    %76 = vector.broadcast %75 : vector<8x1xf32> to vector<8x768xf32>
    %77 = arith.addf %72, %76 : vector<8x768xf32>
    %c0_70 = arith.constant 0 : index
    %c0_71 = arith.constant 0 : index
    %78 = vector.load %arg5[%c0_70, %c0_71] : memref<8x768xf32, #tpu.memory_space<vmem>>, vector<8x768xf32>
    tpu.vector_store %arg5[%c0_70, %c0_71], %77 {strides = array<i32>} : memref<8x768xf32, #tpu.memory_space<vmem>>, vector<8x768xf32>,
    return
  }
}

</mosaic_0001>

<llo_original>
// kernel: pruner_wrapped_conv2d.1
$region0: #{pruner_wrapped_conv2d.1}
  #allocation0 [shape = 'u32[]', space=smem, size = 0x4, offset = 0x4, fixed_abs, tag = 'smem constant byte address 0x4 - core index']
  #allocation1 [shape = 'u32[144,128]{1,0:T(1,128)}', space=vmem, size = 0x12000, scoped, tag = 'internal scratch']
  %s0 = inlined_call_operand.vmem [shape: f32[4,896], index: 0, kind: input, shape index: {}]
  %s1 = inlined_call_operand.vmem [shape: f32[9,8,4], index: 1, kind: input, shape index: {}]
  %s2 = inlined_call_operand.vmem [shape: f32[9,8,4], index: 2, kind: input, shape index: {}]
  %s3 = inlined_call_operand.vmem [shape: f32[8,1], index: 3, kind: input, shape index: {}]
  %s4 = inlined_call_operand.vmem [shape: f32[8,1], index: 4, kind: input, shape index: {}]
  %s5 = inlined_call_operand.vmem [shape: f32[8,768], index: 5, kind: output, shape index: {}]
  %s6 = sld [smem:[#allocation0]]
  $region30: #{pruner_wrapped_conv2d.1} parent=0
    _
  %s8 = ssub.s32 1, %s6
  %s9 = scalar_select 0, %s8, %s6
  // Predicated region
  $region2: #{pruner_wrapped_conv2d.1} parent=0 // pred_check
    _
  $region3: #{pruner_wrapped_conv2d.1} parent=0 // pred_check_branch
    %11 = sbr.rel (0) target = $region5
  $region4: #{pruner_wrapped_conv2d.1} parent=0 // pred_region
    _
  $region5: #{pruner_wrapped_conv2d.1} parent=0 // pred_fallthru
    _
  // Predicated region
  $region6: #{pruner_wrapped_conv2d.1} parent=0 // pred_check
    _
  $region7: #{pruner_wrapped_conv2d.1} parent=0 // pred_check_branch
    %13 = sbr.rel (0) target = $region9
  $region8: #{pruner_wrapped_conv2d.1} parent=0 // pred_region
    _
  $region9: #{pruner_wrapped_conv2d.1} parent=0 // pred_fallthru
    _
  // Predicated region
  $region10: #{pruner_wrapped_conv2d.1} parent=0 // pred_check
    _
  $region11: #{pruner_wrapped_conv2d.1} parent=0 // pred_check_branch
    %15 = sbr.rel (0) target = $region13
  $region12: #{pruner_wrapped_conv2d.1} parent=0 // pred_region
    _
  $region13: #{pruner_wrapped_conv2d.1} parent=0 // pred_fallthru
    _
  // Predicated region
  $region14: #{pruner_wrapped_conv2d.1} parent=0 // pred_check
    _
  $region15: #{pruner_wrapped_conv2d.1} parent=0 // pred_check_branch
    %17 = sbr.rel (0) target = $region17
  $region16: #{pruner_wrapped_conv2d.1} parent=0 // pred_region
    _
  $region17: #{pruner_wrapped_conv2d.1} parent=0 // pred_fallthru
    _
  // Predicated region
  $region18: #{pruner_wrapped_conv2d.1} parent=0 // pred_check
    _
  $region19: #{pruner_wrapped_conv2d.1} parent=0 // pred_check_branch
    %19 = sbr.rel (0) target = $region21
  $region20: #{pruner_wrapped_conv2d.1} parent=0 // pred_region
    _
  $region21: #{pruner_wrapped_conv2d.1} parent=0 // pred_fallthru
    _
  %v20 = vld [vmem:[%s1] sm:$0xff]
  %v21 = vld [vmem:[%s2] sm:$0xff]
  %v22 = vmul.f32 %v20, %v21
  %v23 = vld [vmem:[%s0] sm:$0xff]
  %v24 = vld [vmem:[%s0 + $0x8] sm:$0xff]
  %v25 = vld [vmem:[%s0 + $0x10] sm:$0xff]
  %s26 = scalar_lea.vmem %s1, 8
  %v27 = vld [vmem:[%s26] sm:$0xff]
  %s28 = scalar_lea.vmem %s2, 8
  %v29 = vld [vmem:[%s28] sm:$0xff]
  %v30 = vmul.f32 %v27, %v29
  %v31 = vld [vmem:[%s0] sm:$0xff]
  %v32 = vld [vmem:[%s0 + $0x8] sm:$0xff]
  %v33 = vld [vmem:[%s0 + $0x10] sm:$0xff]
  %v34 = vld [vmem:[%s0 + $0x18] sm:$0xf]
  %v39 = vcombine.high %v31, %v31
  %v40 = vcombine.high %v32, %v32
  %v41 = vcombine.high %v33, %v33
  %42 = vrot.lane.b32.xlu0 %v31, 127
  %v43 = vpop.permute.xlu0 %42
  %44 = vrot.lane.b32.xlu0 %v39, 127
  %v45 = vpop.permute.xlu0 %44
  %46 = vrot.lane.b32.xlu0 %v32, 127
  %v47 = vpop.permute.xlu0 %46
  %48 = vrot.lane.b32.xlu0 %v40, 127
  %v49 = vpop.permute.xlu0 %48
  %50 = vrot.lane.b32.xlu0 %v33, 127
  %v51 = vpop.permute.xlu0 %50
  %52 = vrot.lane.b32.xlu0 %v41, 127
  %v53 = vpop.permute.xlu0 %52
  %54 = vrot.lane.b32.xlu0 %v34, 127
  %v55 = vpop.permute.xlu0 %54
  %vm56 = vcmask 1039360
  %v57 = vsel %vm56, %v43, %v45
  %v58 = vsel %vm56, %v45, %v47
  %v59 = vsel %vm56, %v47, %v49
  %v60 = vsel %vm56, %v49, %v51
  %v61 = vsel %vm56, %v51, %v53
  %v62 = vsel %vm56, %v53, %v55
  %vm63 = vcmask 31744
  %v65 = vsel %vm63, %v30, 0
  %vm67 = vcmask 1043456
  %v68 = vsel %vm67, %v57, 0
  %v70 = vsel %vm67, %v58, 0
  %v72 = vsel %vm67, %v59, 0
  %v74 = vsel %vm67, %v60, 0
  %v76 = vsel %vm67, %v61, 0
  %v78 = vsel %vm67, %v62, 0
  %80 = vmatprep.subr.mxu0 %v70
  %81 = vmatpush1.msra.mxu0 %v68
  %82 = vmatprep.subr.mxu0 0.0
  %83 = vmatpush1.msra.mxu0 0.0
  %84 = vmatprep.subr.mxu0 0.0
  %85 = vmatpush1.msra.mxu0 0.0
  %86 = vmatprep.subr.mxu0 0.0
  %87 = vmatpush1.msra.mxu0 0.0
  %88 = vmatprep.subr.mxu0 0.0
  %89 = vmatpush1.msra.mxu0 0.0
  %90 = vmatprep.subr.mxu0 0.0
  %91 = vmatpush1.msra.mxu0 0.0
  %92 = vmatprep.subr.mxu0 0.0
  %93 = vmatpush1.msra.mxu0 0.0
  %94 = vmatprep.subr.mxu0 0.0
  %95 = vmatpush1.msra.mxu0 0.0
  %96 = vmatprep.subr.mxu0 0.0
  %97 = vmatpush1.msra.mxu0 0.0
  %98 = vmatprep.subr.mxu0 0.0
  %99 = vmatpush1.msra.mxu0 0.0
  %100 = vmatprep.subr.mxu0 0.0
  %101 = vmatpush1.msra.mxu0 0.0
  %102 = vmatprep.subr.mxu0 0.0
  %103 = vmatpush1.msra.mxu0 0.0
  %104 = vmatprep.subr.mxu0 0.0
  %105 = vmatpush1.msra.mxu0 0.0
  %106 = vmatprep.subr.mxu0 0.0
  %107 = vmatpush1.msra.mxu0 0.0
  %108 = vmatprep.subr.mxu0 0.0
  %109 = vmatpush1.msra.mxu0 0.0
  %110 = vmatprep.subr.mxu0 0.0
  %111 = vmatpush1.msra.mxu0 0.0
  %112 = vmatprep.subr.mxu0 0.0
  %113 = vmatpush1.msra.mxu0 0.0
  %114 = vmatprep.subr.mxu0 0.0
  %115 = vmatpush1.msra.mxu0 0.0
  %116 = vmatprep.subr.mxu0 0.0
  %117 = vmatpush1.msra.mxu0 0.0
  %118 = vmatprep.subr.mxu0 0.0
  %119 = vmatpush1.msra.mxu0 0.0
  %120 = vmatprep.subr.mxu0 0.0
  %121 = vmatpush1.msra.mxu0 0.0
  %122 = vmatprep.subr.mxu0 0.0
  %123 = vmatpush1.msra.mxu0 0.0
  %124 = vmatprep.subr.mxu0 0.0
  %125 = vmatpush1.msra.mxu0 0.0
  %126 = vmatprep.subr.mxu0 0.0
  %127 = vmatpush1.msra.mxu0 0.0
  %128 = vmatprep.subr.mxu0 0.0
  %129 = vmatpush1.msra.mxu0 0.0
  %130 = vmatprep.subr.mxu0 0.0
  %131 = vmatpush1.msra.mxu0 0.0
  %132 = vmatprep.subr.mxu0 0.0
  %133 = vmatpush1.msra.mxu0 0.0
  %134 = vmatprep.subr.mxu0 0.0
  %135 = vmatpush1.msra.mxu0 0.0
  %136 = vmatprep.subr.mxu0 0.0
  %137 = vmatpush1.msra.mxu0 0.0
  %138 = vmatprep.subr.mxu0 0.0
  %139 = vmatpush1.msra.mxu0 0.0
  %140 = vmatprep.subr.mxu0 0.0
  %141 = vmatpush1.msra.mxu0 0.0
  %142 = vmatprep.subr.mxu0 0.0
  %143 = vmatpush1.msra.mxu0 0.0
  %144 = vmatprep.mubr.f32.mxu0 0.0
  %145 = vmatmul.mubr.f32.gmra.mrb[0].mxu0 %v65
  %v146 = vpop.f32.mrb[0].mxu0
  %v147 = vadd.f32 0.0, %v146
  %v148 = vpop.f32.mrb[0].mxu0
  %v149 = vadd.f32 0.0, %v148
  %150 = vdwg.mxu0
  %151 = vmatprep.subr.mxu0 %v74
  %152 = vmatpush1.msra.mxu0 %v72
  %153 = vmatprep.subr.mxu0 0.0
  %154 = vmatpush1.msra.mxu0 0.0
  %155 = vmatprep.subr.mxu0 0.0
  %156 = vmatpush1.msra.mxu0 0.0
  %157 = vmatprep.subr.mxu0 0.0
  %158 = vmatpush1.msra.mxu0 0.0
  %159 = vmatprep.subr.mxu0 0.0
  %160 = vmatpush1.msra.mxu0 0.0
  %161 = vmatprep.subr.mxu0 0.0
  %162 = vmatpush1.msra.mxu0 0.0
  %163 = vmatprep.subr.mxu0 0.0
  %164 = vmatpush1.msra.mxu0 0.0
  %165 = vmatprep.subr.mxu0 0.0
  %166 = vmatpush1.msra.mxu0 0.0
  %167 = vmatprep.subr.mxu0 0.0
  %168 = vmatpush1.msra.mxu0 0.0
  %169 = vmatprep.subr.mxu0 0.0
  %170 = vmatpush1.msra.mxu0 0.0
  %171 = vmatprep.subr.mxu0 0.0
  %172 = vmatpush1.msra.mxu0 0.0
  %173 = vmatprep.subr.mxu0 0.0
  %174 = vmatpush1.msra.mxu0 0.0
  %175 = vmatprep.subr.mxu0 0.0
  %176 = vmatpush1.msra.mxu0 0.0
  %177 = vmatprep.subr.mxu0 0.0
  %178 = vmatpush1.msra.mxu0 0.0
  %179 = vmatprep.subr.mxu0 0.0
  %180 = vmatpush1.msra.mxu0 0.0
  %181 = vmatprep.subr.mxu0 0.0
  %182 = vmatpush1.msra.mxu0 0.0
  %183 = vmatprep.subr.mxu0 0.0
  %184 = vmatpush1.msra.mxu0 0.0
  %185 = vmatprep.subr.mxu0 0.0
  %186 = vmatpush1.msra.mxu0 0.0
  %187 = vmatprep.subr.mxu0 0.0
  %188 = vmatpush1.msra.mxu0 0.0
  %189 = vmatprep.subr.mxu0 0.0
  %190 = vmatpush1.msra.mxu0 0.0
  %191 = vmatprep.subr.mxu0 0.0
  %192 = vmatpush1.msra.mxu0 0.0
  %193 = vmatprep.subr.mxu0 0.0
  %194 = vmatpush1.msra.mxu0 0.0
  %195 = vmatprep.subr.mxu0 0.0
  %196 = vmatpush1.msra.mxu0 0.0
  %197 = vmatprep.subr.mxu0 0.0
  %198 = vmatpush1.msra.mxu0 0.0
  %199 = vmatprep.subr.mxu0 0.0
  %200 = vmatpush1.msra.mxu0 0.0
  %201 = vmatprep.subr.mxu0 0.0
  %202 = vmatpush1.msra.mxu0 0.0
  %203 = vmatprep.subr.mxu0 0.0
  %204 = vmatpush1.msra.mxu0 0.0
  %205 = vmatprep.subr.mxu0 0.0
  %206 = vmatpush1.msra.mxu0 0.0
  %207 = vmatprep.subr.mxu0 0.0
  %208 = vmatpush1.msra.mxu0 0.0
  %209 = vmatprep.subr.mxu0 0.0
  %210 = vmatpush1.msra.mxu0 0.0
  %211 = vmatprep.subr.mxu0 0.0
  %212 = vmatpush1.msra.mxu0 0.0
  %213 = vmatprep.subr.mxu0 0.0
  %214 = vmatpush1.msra.mxu0 0.0
  %215 = vmatprep.mubr.f32.mxu0 0.0
  %216 = vmatmul.mubr.f32.gmra.mrb[0].mxu0 %v65
  %v217 = vpop.f32.mrb[0].mxu0
  %v218 = vadd.f32 0.0, %v217
  %v219 = vpop.f32.mrb[0].mxu0
  %v220 = vadd.f32 0.0, %v219
  %221 = vdwg.mxu0
  %222 = vmatprep.subr.mxu0 %v78
  %223 = vmatpush1.msra.mxu0 %v76
  %224 = vmatprep.subr.mxu0 0.0
  %225 = vmatpush1.msra.mxu0 0.0
  %226 = vmatprep.subr.mxu0 0.0
  %227 = vmatpush1.msra.mxu0 0.0
  %228 = vmatprep.subr.mxu0 0.0
  %229 = vmatpush1.msra.mxu0 0.0
  %230 = vmatprep.subr.mxu0 0.0
  %231 = vmatpush1.msra.mxu0 0.0
  %232 = vmatprep.subr.mxu0 0.0
  %233 = vmatpush1.msra.mxu0 0.0
  %234 = vmatprep.subr.mxu0 0.0
  %235 = vmatpush1.msra.mxu0 0.0
  %236 = vmatprep.subr.mxu0 0.0
  %237 = vmatpush1.msra.mxu0 0.0
  %238 = vmatprep.subr.mxu0 0.0
  %239 = vmatpush1.msra.mxu0 0.0
  %240 = vmatprep.subr.mxu0 0.0
  %241 = vmatpush1.msra.mxu0 0.0
  %242 = vmatprep.subr.mxu0 0.0
  %243 = vmatpush1.msra.mxu0 0.0
  %244 = vmatprep.subr.mxu0 0.0
  %245 = vmatpush1.msra.mxu0 0.0
  %246 = vmatprep.subr.mxu0 0.0
  %247 = vmatpush1.msra.mxu0 0.0
  %248 = vmatprep.subr.mxu0 0.0
  %249 = vmatpush1.msra.mxu0 0.0
  %250 = vmatprep.subr.mxu0 0.0
  %251 = vmatpush1.msra.mxu0 0.0
  %252 = vmatprep.subr.mxu0 0.0
  %253 = vmatpush1.msra.mxu0 0.0
  %254 = vmatprep.subr.mxu0 0.0
  %255 = vmatpush1.msra.mxu0 0.0
  %256 = vmatprep.subr.mxu0 0.0
  %257 = vmatpush1.msra.mxu0 0.0
  %258 = vmatprep.subr.mxu0 0.0
  %259 = vmatpush1.msra.mxu0 0.0
  %260 = vmatprep.subr.mxu0 0.0
  %261 = vmatpush1.msra.mxu0 0.0
  %262 = vmatprep.subr.mxu0 0.0
  %263 = vmatpush1.msra.mxu0 0.0
  %264 = vmatprep.subr.mxu0 0.0
  %265 = vmatpush1.msra.mxu0 0.0
  %266 = vmatprep.subr.mxu0 0.0
  %267 = vmatpush1.msra.mxu0 0.0
  %268 = vmatprep.subr.mxu0 0.0
  %269 = vmatpush1.msra.mxu0 0.0
  %270 = vmatprep.subr.mxu0 0.0
  %271 = vmatpush1.msra.mxu0 0.0
  %272 = vmatprep.subr.mxu0 0.0
  %273 = vmatpush1.msra.mxu0 0.0
  %274 = vmatprep.subr.mxu0 0.0
  %275 = vmatpush1.msra.mxu0 0.0
  %276 = vmatprep.subr.mxu0 0.0
  %277 = vmatpush1.msra.mxu0 0.0
  %278 = vmatprep.subr.mxu0 0.0
  %279 = vmatpush1.msra.mxu0 0.0
  %280 = vmatprep.subr.mxu0 0.0
  %281 = vmatpush1.msra.mxu0 0.0
  %282 = vmatprep.subr.mxu0 0.0
  %283 = vmatpush1.msra.mxu0 0.0
  %284 = vmatprep.subr.mxu0 0.0
  %285 = vmatpush1.msra.mxu0 0.0
  %286 = vmatprep.mubr.f32.mxu0 0.0
  %287 = vmatmul.mubr.f32.gmra.mrb[0].mxu0 %v65
  %v288 = vpop.f32.mrb[0].mxu0
  %v289 = vadd.f32 0.0, %v288
  %v290 = vpop.f32.mrb[0].mxu0
  %v291 = vadd.f32 0.0, %v290
  %292 = vdwg.mxu0
  %v296 = vcombine.high %v23, %v23
  %v297 = vcombine.high %v24, %v24
  %v298 = vcombine.high %v25, %v25
  %v300 = vsel %vm63, %v22, 0
  %v302 = vsel %vm67, %v23, 0
  %v304 = vsel %vm67, %v296, 0
  %v306 = vsel %vm67, %v24, 0
  %v308 = vsel %vm67, %v297, 0
  %v310 = vsel %vm67, %v25, 0
  %v312 = vsel %vm67, %v298, 0
  %314 = vmatprep.subr.mxu0 %v304
  %315 = vmatpush1.msra.mxu0 %v302
  %316 = vmatprep.subr.mxu0 0.0
  %317 = vmatpush1.msra.mxu0 0.0
  %318 = vmatprep.subr.mxu0 0.0
  %319 = vmatpush1.msra.mxu0 0.0
  %320 = vmatprep.subr.mxu0 0.0
  %321 = vmatpush1.msra.mxu0 0.0
  %322 = vmatprep.subr.mxu0 0.0
  %323 = vmatpush1.msra.mxu0 0.0
  %324 = vmatprep.subr.mxu0 0.0
  %325 = vmatpush1.msra.mxu0 0.0
  %326 = vmatprep.subr.mxu0 0.0
  %327 = vmatpush1.msra.mxu0 0.0
  %328 = vmatprep.subr.mxu0 0.0
  %329 = vmatpush1.msra.mxu0 0.0
  %330 = vmatprep.subr.mxu0 0.0
  %331 = vmatpush1.msra.mxu0 0.0
  %332 = vmatprep.subr.mxu0 0.0
  %333 = vmatpush1.msra.mxu0 0.0
  %334 = vmatprep.subr.mxu0 0.0
  %335 = vmatpush1.msra.mxu0 0.0
  %336 = vmatprep.subr.mxu0 0.0
  %337 = vmatpush1.msra.mxu0 0.0
  %338 = vmatprep.subr.mxu0 0.0
  %339 = vmatpush1.msra.mxu0 0.0
  %340 = vmatprep.subr.mxu0 0.0
  %341 = vmatpush1.msra.mxu0 0.0
  %342 = vmatprep.subr.mxu0 0.0
  %343 = vmatpush1.msra.mxu0 0.0
  %344 = vmatprep.subr.mxu0 0.0
  %345 = vmatpush1.msra.mxu0 0.0
  %346 = vmatprep.subr.mxu0 0.0
  %347 = vmatpush1.msra.mxu0 0.0
  %348 = vmatprep.subr.mxu0 0.0
  %349 = vmatpush1.msra.mxu0 0.0
  %350 = vmatprep.subr.mxu0 0.0
  %351 = vmatpush1.msra.mxu0 0.0
  %352 = vmatprep.subr.mxu0 0.0
  %353 = vmatpush1.msra.mxu0 0.0
  %354 = vmatprep.subr.mxu0 0.0
  %355 = vmatpush1.msra.mxu0 0.0
  %356 = vmatprep.subr.mxu0 0.0
  %357 = vmatpush1.msra.mxu0 0.0
  %358 = vmatprep.subr.mxu0 0.0
  %359 = vmatpush1.msra.mxu0 0.0
  %360 = vmatprep.subr.mxu0 0.0
  %361 = vmatpush1.msra.mxu0 0.0
  %362 = vmatprep.subr.mxu0 0.0
  %363 = vmatpush1.msra.mxu0 0.0
  %364 = vmatprep.subr.mxu0 0.0
  %365 = vmatpush1.msra.mxu0 0.0
  %366 = vmatprep.subr.mxu0 0.0
  %367 = vmatpush1.msra.mxu0 0.0
  %368 = vmatprep.subr.mxu0 0.0
  %369 = vmatpush1.msra.mxu0 0.0
  %370 = vmatprep.subr.mxu0 0.0
  %371 = vmatpush1.msra.mxu0 0.0
  %372 = vmatprep.subr.mxu0 0.0
  %373 = vmatpush1.msra.mxu0 0.0
  %374 = vmatprep.subr.mxu0 0.0
  %375 = vmatpush1.msra.mxu0 0.0
  %376 = vmatprep.subr.mxu0 0.0
  %377 = vmatpush1.msra.mxu0 0.0
  %378 = vmatprep.mubr.f32.mxu0 0.0
  %379 = vmatmul.mubr.f32.gmra.mrb[0].mxu0 %v300
  %v380 = vpop.f32.mrb[0].mxu0
  %v381 = vadd.f32 %v147, %v380
  %v382 = vpop.f32.mrb[0].mxu0
  %v383 = vadd.f32 %v149, %v382
  %384 = vdwg.mxu0
  %385 = vmatprep.subr.mxu0 %v308
  %386 = vmatpush1.msra.mxu0 %v306
  %387 = vmatprep.subr.mxu0 0.0
  %388 = vmatpush1.msra.mxu0 0.0
  %389 = vmatprep.subr.mxu0 0.0
  %390 = vmatpush1.msra.mxu0 0.0
  %391 = vmatprep.subr.mxu0 0.0
  %392 = vmatpush1.msra.mxu0 0.0
  %393 = vmatprep.subr.mxu0 0.0
  %394 = vmatpush1.msra.mxu0 0.0
  %395 = vmatprep.subr.mxu0 0.0
  %396 = vmatpush1.msra.mxu0 0.0
  %397 = vmatprep.subr.mxu0 0.0
  %398 = vmatpush1.msra.mxu0 0.0
  %399 = vmatprep.subr.mxu0 0.0
  %400 = vmatpush1.msra.mxu0 0.0
  %401 = vmatprep.subr.mxu0 0.0
  %402 = vmatpush1.msra.mxu0 0.0
  %403 = vmatprep.subr.mxu0 0.0
  %404 = vmatpush1.msra.mxu0 0.0
  %405 = vmatprep.subr.mxu0 0.0
  %406 = vmatpush1.msra.mxu0 0.0
  %407 = vmatprep.subr.mxu0 0.0
  %408 = vmatpush1.msra.mxu0 0.0
  %409 = vmatprep.subr.mxu0 0.0
  %410 = vmatpush1.msra.mxu0 0.0
  %411 = vmatprep.subr.mxu0 0.0
  %412 = vmatpush1.msra.mxu0 0.0
  %413 = vmatprep.subr.mxu0 0.0
  %414 = vmatpush1.msra.mxu0 0.0
  %415 = vmatprep.subr.mxu0 0.0
  %416 = vmatpush1.msra.mxu0 0.0
  %417 = vmatprep.subr.mxu0 0.0
  %418 = vmatpush1.msra.mxu0 0.0
  %419 = vmatprep.subr.mxu0 0.0
  %420 = vmatpush1.msra.mxu0 0.0
  %421 = vmatprep.subr.mxu0 0.0
  %422 = vmatpush1.msra.mxu0 0.0
  %423 = vmatprep.subr.mxu0 0.0
  %424 = vmatpush1.msra.mxu0 0.0
  %425 = vmatprep.subr.mxu0 0.0
  %426 = vmatpush1.msra.mxu0 0.0
  %427 = vmatprep.subr.mxu0 0.0
  %428 = vmatpush1.msra.mxu0 0.0
  %429 = vmatprep.subr.mxu0 0.0
  %430 = vmatpush1.msra.mxu0 0.0
  %431 = vmatprep.subr.mxu0 0.0
  %432 = vmatpush1.msra.mxu0 0.0
  %433 = vmatprep.subr.mxu0 0.0
  %434 = vmatpush1.msra.mxu0 0.0
  %435 = vmatprep.subr.mxu0 0.0
  %436 = vmatpush1.msra.mxu0 0.0
  %437 = vmatprep.subr.mxu0 0.0
  %438 = vmatpush1.msra.mxu0 0.0
  %439 = vmatprep.subr.mxu0 0.0
  %440 = vmatpush1.msra.mxu0 0.0
  %441 = vmatprep.subr.mxu0 0.0
  %442 = vmatpush1.msra.mxu0 0.0
  %443 = vmatprep.subr.mxu0 0.0
  %444 = vmatpush1.msra.mxu0 0.0
  %445 = vmatprep.subr.mxu0 0.0
  %446 = vmatpush1.msra.mxu0 0.0
  %447 = vmatprep.subr.mxu0 0.0
  %448 = vmatpush1.msra.mxu0 0.0
  %449 = vmatprep.mubr.f32.mxu0 0.0
  %450 = vmatmul.mubr.f32.gmra.mrb[0].mxu0 %v300
  %v451 = vpop.f32.mrb[0].mxu0
  %v452 = vadd.f32 %v218, %v451
  %v453 = vpop.f32.mrb[0].mxu0
  %v454 = vadd.f32 %v220, %v453
  %455 = vdwg.mxu0
  %456 = vmatprep.subr.mxu0 %v312
  %457 = vmatpush1.msra.mxu0 %v310
  %458 = vmatprep.subr.mxu0 0.0
  %459 = vmatpush1.msra.mxu0 0.0
  %460 = vmatprep.subr.mxu0 0.0
  %461 = vmatpush1.msra.mxu0 0.0
  %462 = vmatprep.subr.mxu0 0.0
  %463 = vmatpush1.msra.mxu0 0.0
  %464 = vmatprep.subr.mxu0 0.0
  %465 = vmatpush1.msra.mxu0 0.0
  %466 = vmatprep.subr.mxu0 0.0
  %467 = vmatpush1.msra.mxu0 0.0
  %468 = vmatprep.subr.mxu0 0.0
  %469 = vmatpush1.msra.mxu0 0.0
  %470 = vmatprep.subr.mxu0 0.0
  %471 = vmatpush1.msra.mxu0 0.0
  %472 = vmatprep.subr.mxu0 0.0
  %473 = vmatpush1.msra.mxu0 0.0
  %474 = vmatprep.subr.mxu0 0.0
  %475 = vmatpush1.msra.mxu0 0.0
  %476 = vmatprep.subr.mxu0 0.0
  %477 = vmatpush1.msra.mxu0 0.0
  %478 = vmatprep.subr.mxu0 0.0
  %479 = vmatpush1.msra.mxu0 0.0
  %480 = vmatprep.subr.mxu0 0.0
  %481 = vmatpush1.msra.mxu0 0.0
  %482 = vmatprep.subr.mxu0 0.0
  %483 = vmatpush1.msra.mxu0 0.0
  %484 = vmatprep.subr.mxu0 0.0
  %485 = vmatpush1.msra.mxu0 0.0
  %486 = vmatprep.subr.mxu0 0.0
  %487 = vmatpush1.msra.mxu0 0.0
  %488 = vmatprep.subr.mxu0 0.0
  %489 = vmatpush1.msra.mxu0 0.0
  %490 = vmatprep.subr.mxu0 0.0
  %491 = vmatpush1.msra.mxu0 0.0
  %492 = vmatprep.subr.mxu0 0.0
  %493 = vmatpush1.msra.mxu0 0.0
  %494 = vmatprep.subr.mxu0 0.0
  %495 = vmatpush1.msra.mxu0 0.0
  %496 = vmatprep.subr.mxu0 0.0
  %497 = vmatpush1.msra.mxu0 0.0
  %498 = vmatprep.subr.mxu0 0.0
  %499 = vmatpush1.msra.mxu0 0.0
  %500 = vmatprep.subr.mxu0 0.0
  %501 = vmatpush1.msra.mxu0 0.0
  %502 = vmatprep.subr.mxu0 0.0
  %503 = vmatpush1.msra.mxu0 0.0
  %504 = vmatprep.subr.mxu0 0.0
  %505 = vmatpush1.msra.mxu0 0.0
  %506 = vmatprep.subr.mxu0 0.0
  %507 = vmatpush1.msra.mxu0 0.0
  %508 = vmatprep.subr.mxu0 0.0
  %509 = vmatpush1.msra.mxu0 0.0
  %510 = vmatprep.subr.mxu0 0.0
  %511 = vmatpush1.msra.mxu0 0.0
  %512 = vmatprep.subr.mxu0 0.0
  %513 = vmatpush1.msra.mxu0 0.0
  %514 = vmatprep.subr.mxu0 0.0
  %515 = vmatpush1.msra.mxu0 0.0
  %516 = vmatprep.subr.mxu0 0.0
  %517 = vmatpush1.msra.mxu0 0.0
  %518 = vmatprep.subr.mxu0 0.0
  %519 = vmatpush1.msra.mxu0 0.0
  %520 = vmatprep.mubr.f32.mxu0 0.0
  %521 = vmatmul.mubr.f32.gmra.mrb[0].mxu0 %v300
  %v522 = vpop.f32.mrb[0].mxu0
  %v523 = vadd.f32 %v289, %v522
  %v524 = vpop.f32.mrb[0].mxu0
  %v525 = vadd.f32 %v291, %v524
  %526 = vdwg.mxu0
  %s527 = scalar_lea.vmem %s1, 16
  %v528 = vld [vmem:[%s527] sm:$0xff]
  %s529 = scalar_lea.vmem %s2, 16
  %v530 = vld [vmem:[%s529] sm:$0xff]
  %v531 = vmul.f32 %v528, %v530
  %v532 = vld [vmem:[%s0] sm:$0xff]
  %v533 = vld [vmem:[%s0 + $0x8] sm:$0xff]
  %v534 = vld [vmem:[%s0 + $0x10] sm:$0xff]
  %v535 = vld [vmem:[%s0 + $0x18] sm:$0xf]
  %v540 = vcombine.high %v532, %v532
  %v541 = vcombine.high %v533, %v533
  %v542 = vcombine.high %v534, %v534
  %543 = vrot.lane.b32.xlu0 %v532, 126
  %v544 = vpop.permute.xlu0 %543
  %545 = vrot.lane.b32.xlu0 %v540, 126
  %v546 = vpop.permute.xlu0 %545
  %547 = vrot.lane.b32.xlu0 %v533, 126
  %v548 = vpop.permute.xlu0 %547
  %549 = vrot.lane.b32.xlu0 %v541, 126
  %v550 = vpop.permute.xlu0 %549
  %551 = vrot.lane.b32.xlu0 %v534, 126
  %v552 = vpop.permute.xlu0 %551
  %553 = vrot.lane.b32.xlu0 %v542, 126
  %v554 = vpop.permute.xlu0 %553
  %555 = vrot.lane.b32.xlu0 %v535, 126
  %v556 = vpop.permute.xlu0 %555
  %vm557 = vcmask 1031168
  %v558 = vsel %vm557, %v544, %v546
  %v559 = vsel %vm557, %v546, %v548
  %v560 = vsel %vm557, %v548, %v550
  %v561 = vsel %vm557, %v550, %v552
  %v562 = vsel %vm557, %v552, %v554
  %v563 = vsel %vm557, %v554, %v556
  %v565 = vsel %vm63, %v531, 0
  %v567 = vsel %vm67, %v558, 0
  %v569 = vsel %vm67, %v559, 0
  %v571 = vsel %vm67, %v560, 0
  %v573 = vsel %vm67, %v561, 0
  %v575 = vsel %vm67, %v562, 0
  %v577 = vsel %vm67, %v563, 0
  %579 = vmatprep.subr.mxu0 %v569
  %580 = vmatpush1.msra.mxu0 %v567
  %581 = vmatprep.subr.mxu0 0.0
  %582 = vmatpush1.msra.mxu0 0.0
  %583 = vmatprep.subr.mxu0 0.0
  %584 = vmatpush1.msra.mxu0 0.0
  %585 = vmatprep.subr.mxu0 0.0
  %586 = vmatpush1.msra.mxu0 0.0
  %587 = vmatprep.subr.mxu0 0.0
  %588 = vmatpush1.msra.mxu0 0.0
  %589 = vmatprep.subr.mxu0 0.0
  %590 = vmatpush1.msra.mxu0 0.0
  %591 = vmatprep.subr.mxu0 0.0
  %592 = vmatpush1.msra.mxu0 0.0
  %593 = vmatprep.subr.mxu0 0.0
  %594 = vmatpush1.msra.mxu0 0.0
  %595 = vmatprep.subr.mxu0 0.0
  %596 = vmatpush1.msra.mxu0 0.0
  %597 = vmatprep.subr.mxu0 0.0
  %598 = vmatpush1.msra.mxu0 0.0
  %599 = vmatprep.subr.mxu0 0.0
  %600 = vmatpush1.msra.mxu0 0.0
  %601 = vmatprep.subr.mxu0 0.0
  %602 = vmatpush1.msra.mxu0 0.0
  %603 = vmatprep.subr.mxu0 0.0
  %604 = vmatpush1.msra.mxu0 0.0
  %605 = vmatprep.subr.mxu0 0.0
  %606 = vmatpush1.msra.mxu0 0.0
  %607 = vmatprep.subr.mxu0 0.0
  %608 = vmatpush1.msra.mxu0 0.0
  %609 = vmatprep.subr.mxu0 0.0
  %610 = vmatpush1.msra.mxu0 0.0
  %611 = vmatprep.subr.mxu0 0.0
  %612 = vmatpush1.msra.mxu0 0.0
  %613 = vmatprep.subr.mxu0 0.0
  %614 = vmatpush1.msra.mxu0 0.0
  %615 = vmatprep.subr.mxu0 0.0
  %616 = vmatpush1.msra.mxu0 0.0
  %617 = vmatprep.subr.mxu0 0.0
  %618 = vmatpush1.msra.mxu0 0.0
  %619 = vmatprep.subr.mxu0 0.0
  %620 = vmatpush1.msra.mxu0 0.0
  %621 = vmatprep.subr.mxu0 0.0
  %622 = vmatpush1.msra.mxu0 0.0
  %623 = vmatprep.subr.mxu0 0.0
  %624 = vmatpush1.msra.mxu0 0.0
  %625 = vmatprep.subr.mxu0 0.0
  %626 = vmatpush1.msra.mxu0 0.0
  %627 = vmatprep.subr.mxu0 0.0
  %628 = vmatpush1.msra.mxu0 0.0
  %629 = vmatprep.subr.mxu0 0.0
  %630 = vmatpush1.msra.mxu0 0.0
  %631 = vmatprep.subr.mxu0 0.0
  %632 = vmatpush1.msra.mxu0 0.0
  %633 = vmatprep.subr.mxu0 0.0
  %634 = vmatpush1.msra.mxu0 0.0
  %635 = vmatprep.subr.mxu0 0.0
  %636 = vmatpush1.msra.mxu0 0.0
  %637 = vmatprep.subr.mxu0 0.0
  %638 = vmatpush1.msra.mxu0 0.0
  %639 = vmatprep.subr.mxu0 0.0
  %640 = vmatpush1.msra.mxu0 0.0
  %641 = vmatprep.subr.mxu0 0.0
  %642 = vmatpush1.msra.mxu0 0.0
  %643 = vmatprep.mubr.f32.mxu0 0.0
  %644 = vmatmul.mubr.f32.gmra.mrb[0].mxu0 %v565
  %v645 = vpop.f32.mrb[0].mxu0
  %v646 = vadd.f32 0.0, %v645
  %v647 = vpop.f32.mrb[0].mxu0
  %v648 = vadd.f32 0.0, %v647
  %649 = vdwg.mxu0
  %650 = vmatprep.subr.mxu0 %v573
  %651 = vmatpush1.msra.mxu0 %v571
  %652 = vmatprep.subr.mxu0 0.0
  %653 = vmatpush1.msra.mxu0 0.0
  %654 = vmatprep.subr.mxu0 0.0
  %655 = vmatpush1.msra.mxu0 0.0
  %656 = vmatprep.subr.mxu0 0.0
  %657 = vmatpush1.msra.mxu0 0.0
  %658 = vmatprep.subr.mxu0 0.0
  %659 = vmatpush1.msra.mxu0 0.0
  %660 = vmatprep.subr.mxu0 0.0
  %661 = vmatpush1.msra.mxu0 0.0
  %662 = vmatprep.subr.mxu0 0.0
  %663 = vmatpush1.msra.mxu0 0.0
  %664 = vmatprep.subr.mxu0 0.0
  %665 = vmatpush1.msra.mxu0 0.0
  %666 = vmatprep.subr.mxu0 0.0
  %667 = vmatpush1.msra.mxu0 0.0
  %668 = vmatprep.subr.mxu0 0.0
  %669 = vmatpush1.msra.mxu0 0.0
  %670 = vmatprep.subr.mxu0 0.0
  %671 = vmatpush1.msra.mxu0 0.0
  %672 = vmatprep.subr.mxu0 0.0
  %673 = vmatpush1.msra.mxu0 0.0
  %674 = vmatprep.subr.mxu0 0.0
  %675 = vmatpush1.msra.mxu0 0.0
  %676 = vmatprep.subr.mxu0 0.0
  %677 = vmatpush1.msra.mxu0 0.0
  %678 = vmatprep.subr.mxu0 0.0
  %679 = vmatpush1.msra.mxu0 0.0
  %680 = vmatprep.subr.mxu0 0.0
  %681 = vmatpush1.msra.mxu0 0.0
  %682 = vmatprep.subr.mxu0 0.0
  %683 = vmatpush1.msra.mxu0 0.0
  %684 = vmatprep.subr.mxu0 0.0
  %685 = vmatpush1.msra.mxu0 0.0
  %686 = vmatprep.subr.mxu0 0.0
  %687 = vmatpush1.msra.mxu0 0.0
  %688 = vmatprep.subr.mxu0 0.0
  %689 = vmatpush1.msra.mxu0 0.0
  %690 = vmatprep.subr.mxu0 0.0
  %691 = vmatpush1.msra.mxu0 0.0
  %692 = vmatprep.subr.mxu0 0.0
  %693 = vmatpush1.msra.mxu0 0.0
  %694 = vmatprep.subr.mxu0 0.0
  %695 = vmatpush1.msra.mxu0 0.0
  %696 = vmatprep.subr.mxu0 0.0
  %697 = vmatpush1.msra.mxu0 0.0
  %698 = vmatprep.subr.mxu0 0.0
  %699 = vmatpush1.msra.mxu0 0.0
  %700 = vmatprep.subr.mxu0 0.0
  %701 = vmatpush1.msra.mxu0 0.0
  %702 = vmatprep.subr.mxu0 0.0
  %703 = vmatpush1.msra.mxu0 0.0
  %704 = vmatprep.subr.mxu0 0.0
  %705 = vmatpush1.msra.mxu0 0.0
  %706 = vmatprep.subr.mxu0 0.0
  %707 = vmatpush1.msra.mxu0 0.0
  %708 = vmatprep.subr.mxu0 0.0
  %709 = vmatpush1.msra.mxu0 0.0
  %710 = vmatprep.subr.mxu0 0.0
  %711 = vmatpush1.msra.mxu0 0.0
  %712 = vmatprep.subr.mxu0 0.0
  %713 = vmatpush1.msra.mxu0 0.0
  %714 = vmatprep.mubr.f32.mxu0 0.0
  %715 = vmatmul.mubr.f32.gmra.mrb[0].mxu0 %v565
  %v716 = vpop.f32.mrb[0].mxu0
  %v717 = vadd.f32 0.0, %v716
  %v718 = vpop.f32.mrb[0].mxu0
  %v719 = vadd.f32 0.0, %v718
  %720 = vdwg.mxu0
  %721 = vmatprep.subr.mxu0 %v577
  %722 = vmatpush1.msra.mxu0 %v575
  %723 = vmatprep.subr.mxu0 0.0
  %724 = vmatpush1.msra.mxu0 0.0
  %725 = vmatprep.subr.mxu0 0.0
  %726 = vmatpush1.msra.mxu0 0.0
  %727 = vmatprep.subr.mxu0 0.0
  %728 = vmatpush1.msra.mxu0 0.0
  %729 = vmatprep.subr.mxu0 0.0
  %730 = vmatpush1.msra.mxu0 0.0
  %731 = vmatprep.subr.mxu0 0.0
  %732 = vmatpush1.msra.mxu0 0.0
  %733 = vmatprep.subr.mxu0 0.0
  %734 = vmatpush1.msra.mxu0 0.0
  %735 = vmatprep.subr.mxu0 0.0
  %736 = vmatpush1.msra.mxu0 0.0
  %737 = vmatprep.subr.mxu0 0.0
  %738 = vmatpush1.msra.mxu0 0.0
  %739 = vmatprep.subr.mxu0 0.0
  %740 = vmatpush1.msra.mxu0 0.0
  %741 = vmatprep.subr.mxu0 0.0
  %742 = vmatpush1.msra.mxu0 0.0
  %743 = vmatprep.subr.mxu0 0.0
  %744 = vmatpush1.msra.mxu0 0.0
  %745 = vmatprep.subr.mxu0 0.0
  %746 = vmatpush1.msra.mxu0 0.0
  %747 = vmatprep.subr.mxu0 0.0
  %748 = vmatpush1.msra.mxu0 0.0
  %749 = vmatprep.subr.mxu0 0.0
  %750 = vmatpush1.msra.mxu0 0.0
  %751 = vmatprep.subr.mxu0 0.0
  %752 = vmatpush1.msra.mxu0 0.0
  %753 = vmatprep.subr.mxu0 0.0
  %754 = vmatpush1.msra.mxu0 0.0
  %755 = vmatprep.subr.mxu0 0.0
  %756 = vmatpush1.msra.mxu0 0.0
  %757 = vmatprep.subr.mxu0 0.0
  %758 = vmatpush1.msra.mxu0 0.0
  %759 = vmatprep.subr.mxu0 0.0
  %760 = vmatpush1.msra.mxu0 0.0
  %761 = vmatprep.subr.mxu0 0.0
  %762 = vmatpush1.msra.mxu0 0.0
  %763 = vmatprep.subr.mxu0 0.0
  %764 = vmatpush1.msra.mxu0 0.0
  %765 = vmatprep.subr.mxu0 0.0
  %766 = vmatpush1.msra.mxu0 0.0
  %767 = vmatprep.subr.mxu0 0.0
  %768 = vmatpush1.msra.mxu0 0.0
  %769 = vmatprep.subr.mxu0 0.0
  %770 = vmatpush1.msra.mxu0 0.0
  %771 = vmatprep.subr.mxu0 0.0
  %772 = vmatpush1.msra.mxu0 0.0
  %773 = vmatprep.subr.mxu0 0.0
  %774 = vmatpush1.msra.mxu0 0.0
  %775 = vmatprep.subr.mxu0 0.0
  %776 = vmatpush1.msra.mxu0 0.0
  %777 = vmatprep.subr.mxu0 0.0
  %778 = vmatpush1.msra.mxu0 0.0
  %779 = vmatprep.subr.mxu0 0.0
  %780 = vmatpush1.msra.mxu0 0.0
  %781 = vmatprep.subr.mxu0 0.0
  %782 = vmatpush1.msra.mxu0 0.0
  %783 = vmatprep.subr.mxu0 0.0
  %784 = vmatpush1.msra.mxu0 0.0
  %785 = vmatprep.mubr.f32.mxu0 0.0
  %786 = vmatmul.mubr.f32.gmra.mrb[0].mxu0 %v565
  %v787 = vpop.f32.mrb[0].mxu0
  %v788 = vadd.f32 0.0, %v787
  %v789 = vpop.f32.mrb[0].mxu0
  %v790 = vadd.f32 0.0, %v789
  %791 = vdwg.mxu0
  %v792 = vadd.f32 %v381, %v646
  %v793 = vadd.f32 %v383, %v648
  %v794 = vadd.f32 %v452, %v717
  %v795 = vadd.f32 %v454, %v719
  %v796 = vadd.f32 %v523, %v788
  %v797 = vadd.f32 %v525, %v790
  %s798 = scalar_lea.vmem %s1, 24
  %v799 = vld [vmem:[%s798] sm:$0xff]
  %s800 = scalar_lea.vmem %s2, 24
  %v801 = vld [vmem:[%s800] sm:$0xff]
  %v802 = vmul.f32 %v799, %v801
  %v803 = vld [vmem:[%s0] sm:$0xff]
  %v804 = vld [vmem:[%s0 + $0x8] sm:$0xff]
  %v805 = vld [vmem:[%s0 + $0x10] sm:$0xff]
  %v806 = vld [vmem:[%s0 + $0x18] sm:$0xf]
  %v811 = vcombine.high %v803, %v803
  %v812 = vcombine.high %v804, %v804
  %v813 = vcombine.high %v805, %v805
  %814 = vrot.lane.b32.xlu0 %v803, 110
  %v815 = vpop.permute.xlu0 %814
  %816 = vrot.lane.b32.xlu0 %v811, 110
  %v817 = vpop.permute.xlu0 %816
  %818 = vrot.lane.b32.xlu0 %v804, 110
  %v819 = vpop.permute.xlu0 %818
  %820 = vrot.lane.b32.xlu0 %v812, 110
  %v821 = vpop.permute.xlu0 %820
  %822 = vrot.lane.b32.xlu0 %v805, 110
  %v823 = vpop.permute.xlu0 %822
  %824 = vrot.lane.b32.xlu0 %v813, 110
  %v825 = vpop.permute.xlu0 %824
  %826 = vrot.lane.b32.xlu0 %v806, 110
  %v827 = vpop.permute.xlu0 %826
  %vm828 = vcmask 900096
  %v829 = vsel %vm828, %v815, %v817
  %v830 = vsel %vm828, %v817, %v819
  %v831 = vsel %vm828, %v819, %v821
  %v832 = vsel %vm828, %v821, %v823
  %v833 = vsel %vm828, %v823, %v825
  %v834 = vsel %vm828, %v825, %v827
  %v836 = vsel %vm63, %v802, 0
  %v838 = vsel %vm67, %v829, 0
  %v840 = vsel %vm67, %v830, 0
  %v842 = vsel %vm67, %v831, 0
  %v844 = vsel %vm67, %v832, 0
  %v846 = vsel %vm67, %v833, 0
  %v848 = vsel %vm67, %v834, 0
  %850 = vmatprep.subr.mxu0 %v840
  %851 = vmatpush1.msra.mxu0 %v838
  %852 = vmatprep.subr.mxu0 0.0
  %853 = vmatpush1.msra.mxu0 0.0
  %854 = vmatprep.subr.mxu0 0.0
  %855 = vmatpush1.msra.mxu0 0.0
  %856 = vmatprep.subr.mxu0 0.0
  %857 = vmatpush1.msra.mxu0 0.0
  %858 = vmatprep.subr.mxu0 0.0
  %859 = vmatpush1.msra.mxu0 0.0
  %860 = vmatprep.subr.mxu0 0.0
  %861 = vmatpush1.msra.mxu0 0.0
  %862 = vmatprep.subr.mxu0 0.0
  %863 = vmatpush1.msra.mxu0 0.0
  %864 = vmatprep.subr.mxu0 0.0
  %865 = vmatpush1.msra.mxu0 0.0
  %866 = vmatprep.subr.mxu0 0.0
  %867 = vmatpush1.msra.mxu0 0.0
  %868 = vmatprep.subr.mxu0 0.0
  %869 = vmatpush1.msra.mxu0 0.0
  %870 = vmatprep.subr.mxu0 0.0
  %871 = vmatpush1.msra.mxu0 0.0
  %872 = vmatprep.subr.mxu0 0.0
  %873 = vmatpush1.msra.mxu0 0.0
  %874 = vmatprep.subr.mxu0 0.0
  %875 = vmatpush1.msra.mxu0 0.0
  %876 = vmatprep.subr.mxu0 0.0
  %877 = vmatpush1.msra.mxu0 0.0
  %878 = vmatprep.subr.mxu0 0.0
  %879 = vmatpush1.msra.mxu0 0.0
  %880 = vmatprep.subr.mxu0 0.0
  %881 = vmatpush1.msra.mxu0 0.0
  %882 = vmatprep.subr.mxu0 0.0
  %883 = vmatpush1.msra.mxu0 0.0
  %884 = vmatprep.subr.mxu0 0.0
  %885 = vmatpush1.msra.mxu0 0.0
  %886 = vmatprep.subr.mxu0 0.0
  %887 = vmatpush1.msra.mxu0 0.0
  %888 = vmatprep.subr.mxu0 0.0
  %889 = vmatpush1.msra.mxu0 0.0
  %890 = vmatprep.subr.mxu0 0.0
  %891 = vmatpush1.msra.mxu0 0.0
  %892 = vmatprep.subr.mxu0 0.0
  %893 = vmatpush1.msra.mxu0 0.0
  %894 = vmatprep.subr.mxu0 0.0
  %895 = vmatpush1.msra.mxu0 0.0
  %896 = vmatprep.subr.mxu0 0.0
  %897 = vmatpush1.msra.mxu0 0.0
  %898 = vmatprep.subr.mxu0 0.0
  %899 = vmatpush1.msra.mxu0 0.0
  %900 = vmatprep.subr.mxu0 0.0
  %901 = vmatpush1.msra.mxu0 0.0
  %902 = vmatprep.subr.mxu0 0.0
  %903 = vmatpush1.msra.mxu0 0.0
  %904 = vmatprep.subr.mxu0 0.0
  %905 = vmatpush1.msra.mxu0 0.0
  %906 = vmatprep.subr.mxu0 0.0
  %907 = vmatpush1.msra.mxu0 0.0
  %908 = vmatprep.subr.mxu0 0.0
  %909 = vmatpush1.msra.mxu0 0.0
  %910 = vmatprep.subr.mxu0 0.0
  %911 = vmatpush1.msra.mxu0 0.0
  %912 = vmatprep.subr.mxu0 0.0
  %913 = vmatpush1.msra.mxu0 0.0
  %914 = vmatprep.mubr.f32.mxu0 0.0
  %915 = vmatmul.mubr.f32.gmra.mrb[0].mxu0 %v836
  %v916 = vpop.f32.mrb[0].mxu0
  %v917 = vadd.f32 0.0, %v916
  %v918 = vpop.f32.mrb[0].mxu0
  %v919 = vadd.f32 0.0, %v918
  %920 = vdwg.mxu0
  %921 = vmatprep.subr.mxu0 %v844
  %922 = vmatpush1.msra.mxu0 %v842
  %923 = vmatprep.subr.mxu0 0.0
  %924 = vmatpush1.msra.mxu0 0.0
  %925 = vmatprep.subr.mxu0 0.0
  %926 = vmatpush1.msra.mxu0 0.0
  %927 = vmatprep.subr.mxu0 0.0
  %928 = vmatpush1.msra.mxu0 0.0
  %929 = vmatprep.subr.mxu0 0.0
  %930 = vmatpush1.msra.mxu0 0.0
  %931 = vmatprep.subr.mxu0 0.0
  %932 = vmatpush1.msra.mxu0 0.0
  %933 = vmatprep.subr.mxu0 0.0
  %934 = vmatpush1.msra.mxu0 0.0
  %935 = vmatprep.subr.mxu0 0.0
  %936 = vmatpush1.msra.mxu0 0.0
  %937 = vmatprep.subr.mxu0 0.0
  %938 = vmatpush1.msra.mxu0 0.0
  %939 = vmatprep.subr.mxu0 0.0
  %940 = vmatpush1.msra.mxu0 0.0
  %941 = vmatprep.subr.mxu0 0.0
  %942 = vmatpush1.msra.mxu0 0.0
  %943 = vmatprep.subr.mxu0 0.0
  %944 = vmatpush1.msra.mxu0 0.0
  %945 = vmatprep.subr.mxu0 0.0
  %946 = vmatpush1.msra.mxu0 0.0
  %947 = vmatprep.subr.mxu0 0.0
  %948 = vmatpush1.msra.mxu0 0.0
  %949 = vmatprep.subr.mxu0 0.0
  %950 = vmatpush1.msra.mxu0 0.0
  %951 = vmatprep.subr.mxu0 0.0
  %952 = vmatpush1.msra.mxu0 0.0
  %953 = vmatprep.subr.mxu0 0.0
  %954 = vmatpush1.msra.mxu0 0.0
  %955 = vmatprep.subr.mxu0 0.0
  %956 = vmatpush1.msra.mxu0 0.0
  %957 = vmatprep.subr.mxu0 0.0
  %958 = vmatpush1.msra.mxu0 0.0
  %959 = vmatprep.subr.mxu0 0.0
  %960 = vmatpush1.msra.mxu0 0.0
  %961 = vmatprep.subr.mxu0 0.0
  %962 = vmatpush1.msra.mxu0 0.0
  %963 = vmatprep.subr.mxu0 0.0
  %964 = vmatpush1.msra.mxu0 0.0
  %965 = vmatprep.subr.mxu0 0.0
  %966 = vmatpush1.msra.mxu0 0.0
  %967 = vmatprep.subr.mxu0 0.0
  %968 = vmatpush1.msra.mxu0 0.0
  %969 = vmatprep.subr.mxu0 0.0
  %970 = vmatpush1.msra.mxu0 0.0
  %971 = vmatprep.subr.mxu0 0.0
  %972 = vmatpush1.msra.mxu0 0.0
  %973 = vmatprep.subr.mxu0 0.0
  %974 = vmatpush1.msra.mxu0 0.0
  %975 = vmatprep.subr.mxu0 0.0
  %976 = vmatpush1.msra.mxu0 0.0
  %977 = vmatprep.subr.mxu0 0.0
  %978 = vmatpush1.msra.mxu0 0.0
  %979 = vmatprep.subr.mxu0 0.0
  %980 = vmatpush1.msra.mxu0 0.0
  %981 = vmatprep.subr.mxu0 0.0
  %982 = vmatpush1.msra.mxu0 0.0
  %983 = vmatprep.subr.mxu0 0.0
  %984 = vmatpush1.msra.mxu0 0.0
  %985 = vmatprep.mubr.f32.mxu0 0.0
  %986 = vmatmul.mubr.f32.gmra.mrb[0].mxu0 %v836
  %v987 = vpop.f32.mrb[0].mxu0
  %v988 = vadd.f32 0.0, %v987
  %v989 = vpop.f32.mrb[0].mxu0
  %v990 = vadd.f32 0.0, %v989
  %991 = vdwg.mxu0
  %992 = vmatprep.subr.mxu0 %v848
  %993 = vmatpush1.msra.mxu0 %v846
  %994 = vmatprep.subr.mxu0 0.0
  %995 = vmatpush1.msra.mxu0 0.0
  %996 = vmatprep.subr.mxu0 0.0
  %997 = vmatpush1.msra.mxu0 0.0
  %998 = vmatprep.subr.mxu0 0.0
  %999 = vmatpush1.msra.mxu0 0.0
  %1000 = vmatprep.subr.mxu0 0.0
  %1001 = vmatpush1.msra.mxu0 0.0
  %1002 = vmatprep.subr.mxu0 0.0
  %1003 = vmatpush1.msra.mxu0 0.0
  %1004 = vmatprep.subr.mxu0 0.0
  %1005 = vmatpush1.msra.mxu0 0.0
  %1006 = vmatprep.subr.mxu0 0.0
  %1007 = vmatpush1.msra.mxu0 0.0
  %1008 = vmatprep.subr.mxu0 0.0
  %1009 = vmatpush1.msra.mxu0 0.0
  %1010 = vmatprep.subr.mxu0 0.0
  %1011 = vmatpush1.msra.mxu0 0.0
  %1012 = vmatprep.subr.mxu0 0.0
  %1013 = vmatpush1.msra.mxu0 0.0
  %1014 = vmatprep.subr.mxu0 0.0
  %1015 = vmatpush1.msra.mxu0 0.0
  %1016 = vmatprep.subr.mxu0 0.0
  %1017 = vmatpush1.msra.mxu0 0.0
  %1018 = vmatprep.subr.mxu0 0.0
  %1019 = vmatpush1.msra.mxu0 0.0
  %1020 = vmatprep.subr.mxu0 0.0
  %1021 = vmatpush1.msra.mxu0 0.0
  %1022 = vmatprep.subr.mxu0 0.0
  %1023 = vmatpush1.msra.mxu0 0.0
  %1024 = vmatprep.subr.mxu0 0.0
  %1025 = vmatpush1.msra.mxu0 0.0
  %1026 = vmatprep.subr.mxu0 0.0
  %1027 = vmatpush1.msra.mxu0 0.0
  %1028 = vmatprep.subr.mxu0 0.0
  %1029 = vmatpush1.msra.mxu0 0.0
  %1030 = vmatprep.subr.mxu0 0.0
  %1031 = vmatpush1.msra.mxu0 0.0
  %1032 = vmatprep.subr.mxu0 0.0
  %1033 = vmatpush1.msra.mxu0 0.0
  %1034 = vmatprep.subr.mxu0 0.0
  %1035 = vmatpush1.msra.mxu0 0.0
  %1036 = vmatprep.subr.mxu0 0.0
  %1037 = vmatpush1.msra.mxu0 0.0
  %1038 = vmatprep.subr.mxu0 0.0
  %1039 = vmatpush1.msra.mxu0 0.0
  %1040 = vmatprep.subr.mxu0 0.0
  %1041 = vmatpush1.msra.mxu0 0.0
  %1042 = vmatprep.subr.mxu0 0.0
  %1043 = vmatpush1.msra.mxu0 0.0
  %1044 = vmatprep.subr.mxu0 0.0
  %1045 = vmatpush1.msra.mxu0 0.0
  %1046 = vmatprep.subr.mxu0 0.0
  %1047 = vmatpush1.msra.mxu0 0.0
  %1048 = vmatprep.subr.mxu0 0.0
  %1049 = vmatpush1.msra.mxu0 0.0
  %1050 = vmatprep.subr.mxu0 0.0
  %1051 = vmatpush1.msra.mxu0 0.0
  %1052 = vmatprep.subr.mxu0 0.0
  %1053 = vmatpush1.msra.mxu0 0.0
  %1054 = vmatprep.subr.mxu0 0.0
  %1055 = vmatpush1.msra.mxu0 0.0
  %1056 = vmatprep.mubr.f32.mxu0 0.0
  %1057 = vmatmul.mubr.f32.gmra.mrb[0].mxu0 %v836
  %v1058 = vpop.f32.mrb[0].mxu0
  %v1059 = vadd.f32 0.0, %v1058
  %v1060 = vpop.f32.mrb[0].mxu0
  %v1061 = vadd.f32 0.0, %v1060
  %1062 = vdwg.mxu0
  %v1063 = vadd.f32 %v792, %v917
  %v1064 = vadd.f32 %v793, %v919
  %v1065 = vadd.f32 %v794, %v988
  %v1066 = vadd.f32 %v795, %v990
  %v1067 = vadd.f32 %v796, %v1059
  %v1068 = vadd.f32 %v797, %v1061
  %s1069 = scalar_lea.vmem %s1, 32
  %v1070 = vld [vmem:[%s1069] sm:$0xff]
  %s1071 = scalar_lea.vmem %s2, 32
  %v1072 = vld [vmem:[%s1071] sm:$0xff]
  %v1073 = vmul.f32 %v1070, %v1072
  %v1074 = vld [vmem:[%s0] sm:$0xff]
  %v1075 = vld [vmem:[%s0 + $0x8] sm:$0xff]
  %v1076 = vld [vmem:[%s0 + $0x10] sm:$0xff]
  %v1077 = vld [vmem:[%s0 + $0x18] sm:$0xf]
  %v1082 = vcombine.high %v1074, %v1074
  %v1083 = vcombine.high %v1075, %v1075
  %v1084 = vcombine.high %v1076, %v1076
  %1085 = vrot.lane.b32.xlu0 %v1074, 109
  %v1086 = vpop.permute.xlu0 %1085
  %1087 = vrot.lane.b32.xlu0 %v1082, 109
  %v1088 = vpop.permute.xlu0 %1087
  %1089 = vrot.lane.b32.xlu0 %v1075, 109
  %v1090 = vpop.permute.xlu0 %1089
  %1091 = vrot.lane.b32.xlu0 %v1083, 109
  %v1092 = vpop.permute.xlu0 %1091
  %1093 = vrot.lane.b32.xlu0 %v1076, 109
  %v1094 = vpop.permute.xlu0 %1093
  %1095 = vrot.lane.b32.xlu0 %v1084, 109
  %v1096 = vpop.permute.xlu0 %1095
  %1097 = vrot.lane.b32.xlu0 %v1077, 109
  %v1098 = vpop.permute.xlu0 %1097
  %vm1099 = vcmask 891904
  %v1100 = vsel %vm1099, %v1086, %v1088
  %v1101 = vsel %vm1099, %v1088, %v1090
  %v1102 = vsel %vm1099, %v1090, %v1092
  %v1103 = vsel %vm1099, %v1092, %v1094
  %v1104 = vsel %vm1099, %v1094, %v1096
  %v1105 = vsel %vm1099, %v1096, %v1098
  %v1107 = vsel %vm63, %v1073, 0
  %v1109 = vsel %vm67, %v1100, 0
  %v1111 = vsel %vm67, %v1101, 0
  %v1113 = vsel %vm67, %v1102, 0
  %v1115 = vsel %vm67, %v1103, 0
  %v1117 = vsel %vm67, %v1104, 0
  %v1119 = vsel %vm67, %v1105, 0
  %1121 = vmatprep.subr.mxu0 %v1111
  %1122 = vmatpush1.msra.mxu0 %v1109
  %1123 = vmatprep.subr.mxu0 0.0
  %1124 = vmatpush1.msra.mxu0 0.0
  %1125 = vmatprep.subr.mxu0 0.0
  %1126 = vmatpush1.msra.mxu0 0.0
  %1127 = vmatprep.subr.mxu0 0.0
  %1128 = vmatpush1.msra.mxu0 0.0
  %1129 = vmatprep.subr.mxu0 0.0
  %1130 = vmatpush1.msra.mxu0 0.0
  %1131 = vmatprep.subr.mxu0 0.0
  %1132 = vmatpush1.msra.mxu0 0.0
  %1133 = vmatprep.subr.mxu0 0.0
  %1134 = vmatpush1.msra.mxu0 0.0
  %1135 = vmatprep.subr.mxu0 0.0
  %1136 = vmatpush1.msra.mxu0 0.0
  %1137 = vmatprep.subr.mxu0 0.0
  %1138 = vmatpush1.msra.mxu0 0.0
  %1139 = vmatprep.subr.mxu0 0.0
  %1140 = vmatpush1.msra.mxu0 0.0
  %1141 = vmatprep.subr.mxu0 0.0
  %1142 = vmatpush1.msra.mxu0 0.0
  %1143 = vmatprep.subr.mxu0 0.0
  %1144 = vmatpush1.msra.mxu0 0.0
  %1145 = vmatprep.subr.mxu0 0.0
  %1146 = vmatpush1.msra.mxu0 0.0
  %1147 = vmatprep.subr.mxu0 0.0
  %1148 = vmatpush1.msra.mxu0 0.0
  %1149 = vmatprep.subr.mxu0 0.0
  %1150 = vmatpush1.msra.mxu0 0.0
  %1151 = vmatprep.subr.mxu0 0.0
  %1152 = vmatpush1.msra.mxu0 0.0
  %1153 = vmatprep.subr.mxu0 0.0
  %1154 = vmatpush1.msra.mxu0 0.0
  %1155 = vmatprep.subr.mxu0 0.0
  %1156 = vmatpush1.msra.mxu0 0.0
  %1157 = vmatprep.subr.mxu0 0.0
  %1158 = vmatpush1.msra.mxu0 0.0
  %1159 = vmatprep.subr.mxu0 0.0
  %1160 = vmatpush1.msra.mxu0 0.0
  %1161 = vmatprep.subr.mxu0 0.0
  %1162 = vmatpush1.msra.mxu0 0.0
  %1163 = vmatprep.subr.mxu0 0.0
  %1164 = vmatpush1.msra.mxu0 0.0
  %1165 = vmatprep.subr.mxu0 0.0
  %1166 = vmatpush1.msra.mxu0 0.0
  %1167 = vmatprep.subr.mxu0 0.0
  %1168 = vmatpush1.msra.mxu0 0.0
  %1169 = vmatprep.subr.mxu0 0.0
  %1170 = vmatpush1.msra.mxu0 0.0
  %1171 = vmatprep.subr.mxu0 0.0
  %1172 = vmatpush1.msra.mxu0 0.0
  %1173 = vmatprep.subr.mxu0 0.0
  %1174 = vmatpush1.msra.mxu0 0.0
  %1175 = vmatprep.subr.mxu0 0.0
  %1176 = vmatpush1.msra.mxu0 0.0
  %1177 = vmatprep.subr.mxu0 0.0
  %1178 = vmatpush1.msra.mxu0 0.0
  %1179 = vmatprep.subr.mxu0 0.0
  %1180 = vmatpush1.msra.mxu0 0.0
  %1181 = vmatprep.subr.mxu0 0.0
  %1182 = vmatpush1.msra.mxu0 0.0
  %1183 = vmatprep.subr.mxu0 0.0
  %1184 = vmatpush1.msra.mxu0 0.0
  %1185 = vmatprep.mubr.f32.mxu0 0.0
  %1186 = vmatmul.mubr.f32.gmra.mrb[0].mxu0 %v1107
  %v1187 = vpop.f32.mrb[0].mxu0
  %v1188 = vadd.f32 0.0, %v1187
  %v1189 = vpop.f32.mrb[0].mxu0
  %v1190 = vadd.f32 0.0, %v1189
  %1191 = vdwg.mxu0
  %1192 = vmatprep.subr.mxu0 %v1115
  %1193 = vmatpush1.msra.mxu0 %v1113
  %1194 = vmatprep.subr.mxu0 0.0
  %1195 = vmatpush1.msra.mxu0 0.0
  %1196 = vmatprep.subr.mxu0 0.0
  %1197 = vmatpush1.msra.mxu0 0.0
  %1198 = vmatprep.subr.mxu0 0.0
  %1199 = vmatpush1.msra.mxu0 0.0
  %1200 = vmatprep.subr.mxu0 0.0
  %1201 = vmatpush1.msra.mxu0 0.0
  %1202 = vmatprep.subr.mxu0 0.0
  %1203 = vmatpush1.msra.mxu0 0.0
  %1204 = vmatprep.subr.mxu0 0.0
  %1205 = vmatpush1.msra.mxu0 0.0
  %1206 = vmatprep.subr.mxu0 0.0
  %1207 = vmatpush1.msra.mxu0 0.0
  %1208 = vmatprep.subr.mxu0 0.0
  %1209 = vmatpush1.msra.mxu0 0.0
  %1210 = vmatprep.subr.mxu0 0.0
  %1211 = vmatpush1.msra.mxu0 0.0
  %1212 = vmatprep.subr.mxu0 0.0
  %1213 = vmatpush1.msra.mxu0 0.0
  %1214 = vmatprep.subr.mxu0 0.0
  %1215 = vmatpush1.msra.mxu0 0.0
  %1216 = vmatprep.subr.mxu0 0.0
  %1217 = vmatpush1.msra.mxu0 0.0
  %1218 = vmatprep.subr.mxu0 0.0
  %1219 = vmatpush1.msra.mxu0 0.0
  %1220 = vmatprep.subr.mxu0 0.0
  %1221 = vmatpush1.msra.mxu0 0.0
  %1222 = vmatprep.subr.mxu0 0.0
  %1223 = vmatpush1.msra.mxu0 0.0
  %1224 = vmatprep.subr.mxu0 0.0
  %1225 = vmatpush1.msra.mxu0 0.0
  %1226 = vmatprep.subr.mxu0 0.0
  %1227 = vmatpush1.msra.mxu0 0.0
  %1228 = vmatprep.subr.mxu0 0.0
  %1229 = vmatpush1.msra.mxu0 0.0
  %1230 = vmatprep.subr.mxu0 0.0
  %1231 = vmatpush1.msra.mxu0 0.0
  %1232 = vmatprep.subr.mxu0 0.0
  %1233 = vmatpush1.msra.mxu0 0.0
  %1234 = vmatprep.subr.mxu0 0.0
  %1235 = vmatpush1.msra.mxu0 0.0
  %1236 = vmatprep.subr.mxu0 0.0
  %1237 = vmatpush1.msra.mxu0 0.0
  %1238 = vmatprep.subr.mxu0 0.0
  %1239 = vmatpush1.msra.mxu0 0.0
  %1240 = vmatprep.subr.mxu0 0.0
  %1241 = vmatpush1.msra.mxu0 0.0
  %1242 = vmatprep.subr.mxu0 0.0
  %1243 = vmatpush1.msra.mxu0 0.0
  %1244 = vmatprep.subr.mxu0 0.0
  %1245 = vmatpush1.msra.mxu0 0.0
  %1246 = vmatprep.subr.mxu0 0.0
  %1247 = vmatpush1.msra.mxu0 0.0
  %1248 = vmatprep.subr.mxu0 0.0
  %1249 = vmatpush1.msra.mxu0 0.0
  %1250 = vmatprep.subr.mxu0 0.0
  %1251 = vmatpush1.msra.mxu0 0.0
  %1252 = vmatprep.subr.mxu0 0.0
  %1253 = vmatpush1.msra.mxu0 0.0
  %1254 = vmatprep.subr.mxu0 0.0
  %1255 = vmatpush1.msra.mxu0 0.0
  %1256 = vmatprep.mubr.f32.mxu0 0.0
  %1257 = vmatmul.mubr.f32.gmra.mrb[0].mxu0 %v1107
  %v1258 = vpop.f32.mrb[0].mxu0
  %v1259 = vadd.f32 0.0, %v1258
  %v1260 = vpop.f32.mrb[0].mxu0
  %v1261 = vadd.f32 0.0, %v1260
  %1262 = vdwg.mxu0
  %1263 = vmatprep.subr.mxu0 %v1119
  %1264 = vmatpush1.msra.mxu0 %v1117
  %1265 = vmatprep.subr.mxu0 0.0
  %1266 = vmatpush1.msra.mxu0 0.0
  %1267 = vmatprep.subr.mxu0 0.0
  %1268 = vmatpush1.msra.mxu0 0.0
  %1269 = vmatprep.subr.mxu0 0.0
  %1270 = vmatpush1.msra.mxu0 0.0
  %1271 = vmatprep.subr.mxu0 0.0
  %1272 = vmatpush1.msra.mxu0 0.0
  %1273 = vmatprep.subr.mxu0 0.0
  %1274 = vmatpush1.msra.mxu0 0.0
  %1275 = vmatprep.subr.mxu0 0.0
  %1276 = vmatpush1.msra.mxu0 0.0
  %1277 = vmatprep.subr.mxu0 0.0
  %1278 = vmatpush1.msra.mxu0 0.0
  %1279 = vmatprep.subr.mxu0 0.0
  %1280 = vmatpush1.msra.mxu0 0.0
  %1281 = vmatprep.subr.mxu0 0.0
  %1282 = vmatpush1.msra.mxu0 0.0
  %1283 = vmatprep.subr.mxu0 0.0
  %1284 = vmatpush1.msra.mxu0 0.0
  %1285 = vmatprep.subr.mxu0 0.0
  %1286 = vmatpush1.msra.mxu0 0.0
  %1287 = vmatprep.subr.mxu0 0.0
  %1288 = vmatpush1.msra.mxu0 0.0
  %1289 = vmatprep.subr.mxu0 0.0
  %1290 = vmatpush1.msra.mxu0 0.0
  %1291 = vmatprep.subr.mxu0 0.0
  %1292 = vmatpush1.msra.mxu0 0.0
  %1293 = vmatprep.subr.mxu0 0.0
  %1294 = vmatpush1.msra.mxu0 0.0
  %1295 = vmatprep.subr.mxu0 0.0
  %1296 = vmatpush1.msra.mxu0 0.0
  %1297 = vmatprep.subr.mxu0 0.0
  %1298 = vmatpush1.msra.mxu0 0.0
  %1299 = vmatprep.subr.mxu0 0.0
  %1300 = vmatpush1.msra.mxu0 0.0
  %1301 = vmatprep.subr.mxu0 0.0
  %1302 = vmatpush1.msra.mxu0 0.0
  %1303 = vmatprep.subr.mxu0 0.0
  %1304 = vmatpush1.msra.mxu0 0.0
  %1305 = vmatprep.subr.mxu0 0.0
  %1306 = vmatpush1.msra.mxu0 0.0
  %1307 = vmatprep.subr.mxu0 0.0
  %1308 = vmatpush1.msra.mxu0 0.0
  %1309 = vmatprep.subr.mxu0 0.0
  %1310 = vmatpush1.msra.mxu0 0.0
  %1311 = vmatprep.subr.mxu0 0.0
  %1312 = vmatpush1.msra.mxu0 0.0
  %1313 = vmatprep.subr.mxu0 0.0
  %1314 = vmatpush1.msra.mxu0 0.0
  %1315 = vmatprep.subr.mxu0 0.0
  %1316 = vmatpush1.msra.mxu0 0.0
  %1317 = vmatprep.subr.mxu0 0.0
  %1318 = vmatpush1.msra.mxu0 0.0
  %1319 = vmatprep.subr.mxu0 0.0
  %1320 = vmatpush1.msra.mxu0 0.0
  %1321 = vmatprep.subr.mxu0 0.0
  %1322 = vmatpush1.msra.mxu0 0.0
  %1323 = vmatprep.subr.mxu0 0.0
  %1324 = vmatpush1.msra.mxu0 0.0
  %1325 = vmatprep.subr.mxu0 0.0
  %1326 = vmatpush1.msra.mxu0 0.0
  %1327 = vmatprep.mubr.f32.mxu0 0.0
  %1328 = vmatmul.mubr.f32.gmra.mrb[0].mxu0 %v1107
  %v1329 = vpop.f32.mrb[0].mxu0
  %v1330 = vadd.f32 0.0, %v1329
  %v1331 = vpop.f32.mrb[0].mxu0
  %v1332 = vadd.f32 0.0, %v1331
  %1333 = vdwg.mxu0
  %v1334 = vadd.f32 %v1063, %v1188
  %v1335 = vadd.f32 %v1064, %v1190
  %v1336 = vadd.f32 %v1065, %v1259
  %v1337 = vadd.f32 %v1066, %v1261
  %v1338 = vadd.f32 %v1067, %v1330
  %v1339 = vadd.f32 %v1068, %v1332
  %s1340 = scalar_lea.vmem %s1, 40
  %v1341 = vld [vmem:[%s1340] sm:$0xff]
  %s1342 = scalar_lea.vmem %s2, 40
  %v1343 = vld [vmem:[%s1342] sm:$0xff]
  %v1344 = vmul.f32 %v1341, %v1343
  %v1345 = vld [vmem:[%s0] sm:$0xff]
  %v1346 = vld [vmem:[%s0 + $0x8] sm:$0xff]
  %v1347 = vld [vmem:[%s0 + $0x10] sm:$0xff]
  %v1348 = vld [vmem:[%s0 + $0x18] sm:$0xf]
  %v1353 = vcombine.high %v1345, %v1345
  %v1354 = vcombine.high %v1346, %v1346
  %v1355 = vcombine.high %v1347, %v1347
  %1356 = vrot.lane.b32.xlu0 %v1345, 108
  %v1357 = vpop.permute.xlu0 %1356
  %1358 = vrot.lane.b32.xlu0 %v1353, 108
  %v1359 = vpop.permute.xlu0 %1358
  %1360 = vrot.lane.b32.xlu0 %v1346, 108
  %v1361 = vpop.permute.xlu0 %1360
  %1362 = vrot.lane.b32.xlu0 %v1354, 108
  %v1363 = vpop.permute.xlu0 %1362
  %1364 = vrot.lane.b32.xlu0 %v1347, 108
  %v1365 = vpop.permute.xlu0 %1364
  %1366 = vrot.lane.b32.xlu0 %v1355, 108
  %v1367 = vpop.permute.xlu0 %1366
  %1368 = vrot.lane.b32.xlu0 %v1348, 108
  %v1369 = vpop.permute.xlu0 %1368
  %vm1370 = vcmask 883712
  %v1371 = vsel %vm1370, %v1357, %v1359
  %v1372 = vsel %vm1370, %v1359, %v1361
  %v1373 = vsel %vm1370, %v1361, %v1363
  %v1374 = vsel %vm1370, %v1363, %v1365
  %v1375 = vsel %vm1370, %v1365, %v1367
  %v1376 = vsel %vm1370, %v1367, %v1369
  %v1378 = vsel %vm63, %v1344, 0
  %v1380 = vsel %vm67, %v1371, 0
  %v1382 = vsel %vm67, %v1372, 0
  %v1384 = vsel %vm67, %v1373, 0
  %v1386 = vsel %vm67, %v1374, 0
  %v1388 = vsel %vm67, %v1375, 0
  %v1390 = vsel %vm67, %v1376, 0
  %1392 = vmatprep.subr.mxu0 %v1382
  %1393 = vmatpush1.msra.mxu0 %v1380
  %1394 = vmatprep.subr.mxu0 0.0
  %1395 = vmatpush1.msra.mxu0 0.0
  %1396 = vmatprep.subr.mxu0 0.0
  %1397 = vmatpush1.msra.mxu0 0.0
  %1398 = vmatprep.subr.mxu0 0.0
  %1399 = vmatpush1.msra.mxu0 0.0
  %1400 = vmatprep.subr.mxu0 0.0
  %1401 = vmatpush1.msra.mxu0 0.0
  %1402 = vmatprep.subr.mxu0 0.0
  %1403 = vmatpush1.msra.mxu0 0.0
  %1404 = vmatprep.subr.mxu0 0.0
  %1405 = vmatpush1.msra.mxu0 0.0
  %1406 = vmatprep.subr.mxu0 0.0
  %1407 = vmatpush1.msra.mxu0 0.0
  %1408 = vmatprep.subr.mxu0 0.0
  %1409 = vmatpush1.msra.mxu0 0.0
  %1410 = vmatprep.subr.mxu0 0.0
  %1411 = vmatpush1.msra.mxu0 0.0
  %1412 = vmatprep.subr.mxu0 0.0
  %1413 = vmatpush1.msra.mxu0 0.0
  %1414 = vmatprep.subr.mxu0 0.0
  %1415 = vmatpush1.msra.mxu0 0.0
  %1416 = vmatprep.subr.mxu0 0.0
  %1417 = vmatpush1.msra.mxu0 0.0
  %1418 = vmatprep.subr.mxu0 0.0
  %1419 = vmatpush1.msra.mxu0 0.0
  %1420 = vmatprep.subr.mxu0 0.0
  %1421 = vmatpush1.msra.mxu0 0.0
  %1422 = vmatprep.subr.mxu0 0.0
  %1423 = vmatpush1.msra.mxu0 0.0
  %1424 = vmatprep.subr.mxu0 0.0
  %1425 = vmatpush1.msra.mxu0 0.0
  %1426 = vmatprep.subr.mxu0 0.0
  %1427 = vmatpush1.msra.mxu0 0.0
  %1428 = vmatprep.subr.mxu0 0.0
  %1429 = vmatpush1.msra.mxu0 0.0
  %1430 = vmatprep.subr.mxu0 0.0
  %1431 = vmatpush1.msra.mxu0 0.0
  %1432 = vmatprep.subr.mxu0 0.0
  %1433 = vmatpush1.msra.mxu0 0.0
  %1434 = vmatprep.subr.mxu0 0.0
  %1435 = vmatpush1.msra.mxu0 0.0
  %1436 = vmatprep.subr.mxu0 0.0
  %1437 = vmatpush1.msra.mxu0 0.0
  %1438 = vmatprep.subr.mxu0 0.0
  %1439 = vmatpush1.msra.mxu0 0.0
  %1440 = vmatprep.subr.mxu0 0.0
  %1441 = vmatpush1.msra.mxu0 0.0
  %1442 = vmatprep.subr.mxu0 0.0
  %1443 = vmatpush1.msra.mxu0 0.0
  %1444 = vmatprep.subr.mxu0 0.0
  %1445 = vmatpush1.msra.mxu0 0.0
  %1446 = vmatprep.subr.mxu0 0.0
  %1447 = vmatpush1.msra.mxu0 0.0
  %1448 = vmatprep.subr.mxu0 0.0
  %1449 = vmatpush1.msra.mxu0 0.0
  %1450 = vmatprep.subr.mxu0 0.0
  %1451 = vmatpush1.msra.mxu0 0.0
  %1452 = vmatprep.subr.mxu0 0.0
  %1453 = vmatpush1.msra.mxu0 0.0
  %1454 = vmatprep.subr.mxu0 0.0
  %1455 = vmatpush1.msra.mxu0 0.0
  %1456 = vmatprep.mubr.f32.mxu0 0.0
  %1457 = vmatmul.mubr.f32.gmra.mrb[0].mxu0 %v1378
  %v1458 = vpop.f32.mrb[0].mxu0
  %v1459 = vadd.f32 0.0, %v1458
  %v1460 = vpop.f32.mrb[0].mxu0
  %v1461 = vadd.f32 0.0, %v1460
  %1462 = vdwg.mxu0
  %1463 = vmatprep.subr.mxu0 %v1386
  %1464 = vmatpush1.msra.mxu0 %v1384
  %1465 = vmatprep.subr.mxu0 0.0
  %1466 = vmatpush1.msra.mxu0 0.0
  %1467 = vmatprep.subr.mxu0 0.0
  %1468 = vmatpush1.msra.mxu0 0.0
  %1469 = vmatprep.subr.mxu0 0.0
  %1470 = vmatpush1.msra.mxu0 0.0
  %1471 = vmatprep.subr.mxu0 0.0
  %1472 = vmatpush1.msra.mxu0 0.0
  %1473 = vmatprep.subr.mxu0 0.0
  %1474 = vmatpush1.msra.mxu0 0.0
  %1475 = vmatprep.subr.mxu0 0.0
  %1476 = vmatpush1.msra.mxu0 0.0
  %1477 = vmatprep.subr.mxu0 0.0
  %1478 = vmatpush1.msra.mxu0 0.0
  %1479 = vmatprep.subr.mxu0 0.0
  %1480 = vmatpush1.msra.mxu0 0.0
  %1481 = vmatprep.subr.mxu0 0.0
  %1482 = vmatpush1.msra.mxu0 0.0
  %1483 = vmatprep.subr.mxu0 0.0
  %1484 = vmatpush1.msra.mxu0 0.0
  %1485 = vmatprep.subr.mxu0 0.0
  %1486 = vmatpush1.msra.mxu0 0.0
  %1487 = vmatprep.subr.mxu0 0.0
  %1488 = vmatpush1.msra.mxu0 0.0
  %1489 = vmatprep.subr.mxu0 0.0
  %1490 = vmatpush1.msra.mxu0 0.0
  %1491 = vmatprep.subr.mxu0 0.0
  %1492 = vmatpush1.msra.mxu0 0.0
  %1493 = vmatprep.subr.mxu0 0.0
  %1494 = vmatpush1.msra.mxu0 0.0
  %1495 = vmatprep.subr.mxu0 0.0
  %1496 = vmatpush1.msra.mxu0 0.0
  %1497 = vmatprep.subr.mxu0 0.0
  %1498 = vmatpush1.msra.mxu0 0.0
  %1499 = vmatprep.subr.mxu0 0.0
  %1500 = vmatpush1.msra.mxu0 0.0
  %1501 = vmatprep.subr.mxu0 0.0
  %1502 = vmatpush1.msra.mxu0 0.0
  %1503 = vmatprep.subr.mxu0 0.0
  %1504 = vmatpush1.msra.mxu0 0.0
  %1505 = vmatprep.subr.mxu0 0.0
  %1506 = vmatpush1.msra.mxu0 0.0
  %1507 = vmatprep.subr.mxu0 0.0
  %1508 = vmatpush1.msra.mxu0 0.0
  %1509 = vmatprep.subr.mxu0 0.0
  %1510 = vmatpush1.msra.mxu0 0.0
  %1511 = vmatprep.subr.mxu0 0.0
  %1512 = vmatpush1.msra.mxu0 0.0
  %1513 = vmatprep.subr.mxu0 0.0
  %1514 = vmatpush1.msra.mxu0 0.0
  %1515 = vmatprep.subr.mxu0 0.0
  %1516 = vmatpush1.msra.mxu0 0.0
  %1517 = vmatprep.subr.mxu0 0.0
  %1518 = vmatpush1.msra.mxu0 0.0
  %1519 = vmatprep.subr.mxu0 0.0
  %1520 = vmatpush1.msra.mxu0 0.0
  %1521 = vmatprep.subr.mxu0 0.0
  %1522 = vmatpush1.msra.mxu0 0.0
  %1523 = vmatprep.subr.mxu0 0.0
  %1524 = vmatpush1.msra.mxu0 0.0
  %1525 = vmatprep.subr.mxu0 0.0
  %1526 = vmatpush1.msra.mxu0 0.0
  %1527 = vmatprep.mubr.f32.mxu0 0.0
  %1528 = vmatmul.mubr.f32.gmra.mrb[0].mxu0 %v1378
  %v1529 = vpop.f32.mrb[0].mxu0
  %v1530 = vadd.f32 0.0, %v1529
  %v1531 = vpop.f32.mrb[0].mxu0
  %v1532 = vadd.f32 0.0, %v1531
  %1533 = vdwg.mxu0
  %1534 = vmatprep.subr.mxu0 %v1390
  %1535 = vmatpush1.msra.mxu0 %v1388
  %1536 = vmatprep.subr.mxu0 0.0
  %1537 = vmatpush1.msra.mxu0 0.0
  %1538 = vmatprep.subr.mxu0 0.0
  %1539 = vmatpush1.msra.mxu0 0.0
  %1540 = vmatprep.subr.mxu0 0.0
  %1541 = vmatpush1.msra.mxu0 0.0
  %1542 = vmatprep.subr.mxu0 0.0
  %1543 = vmatpush1.msra.mxu0 0.0
  %1544 = vmatprep.subr.mxu0 0.0
  %1545 = vmatpush1.msra.mxu0 0.0
  %1546 = vmatprep.subr.mxu0 0.0
  %1547 = vmatpush1.msra.mxu0 0.0
  %1548 = vmatprep.subr.mxu0 0.0
  %1549 = vmatpush1.msra.mxu0 0.0
  %1550 = vmatprep.subr.mxu0 0.0
  %1551 = vmatpush1.msra.mxu0 0.0
  %1552 = vmatprep.subr.mxu0 0.0
  %1553 = vmatpush1.msra.mxu0 0.0
  %1554 = vmatprep.subr.mxu0 0.0
  %1555 = vmatpush1.msra.mxu0 0.0
  %1556 = vmatprep.subr.mxu0 0.0
  %1557 = vmatpush1.msra.mxu0 0.0
  %1558 = vmatprep.subr.mxu0 0.0
  %1559 = vmatpush1.msra.mxu0 0.0
  %1560 = vmatprep.subr.mxu0 0.0
  %1561 = vmatpush1.msra.mxu0 0.0
  %1562 = vmatprep.subr.mxu0 0.0
  %1563 = vmatpush1.msra.mxu0 0.0
  %1564 = vmatprep.subr.mxu0 0.0
  %1565 = vmatpush1.msra.mxu0 0.0
  %1566 = vmatprep.subr.mxu0 0.0
  %1567 = vmatpush1.msra.mxu0 0.0
  %1568 = vmatprep.subr.mxu0 0.0
  %1569 = vmatpush1.msra.mxu0 0.0
  %1570 = vmatprep.subr.mxu0 0.0
  %1571 = vmatpush1.msra.mxu0 0.0
  %1572 = vmatprep.subr.mxu0 0.0
  %1573 = vmatpush1.msra.mxu0 0.0
  %1574 = vmatprep.subr.mxu0 0.0
  %1575 = vmatpush1.msra.mxu0 0.0
  %1576 = vmatprep.subr.mxu0 0.0
  %1577 = vmatpush1.msra.mxu0 0.0
  %1578 = vmatprep.subr.mxu0 0.0
  %1579 = vmatpush1.msra.mxu0 0.0
  %1580 = vmatprep.subr.mxu0 0.0
  %1581 = vmatpush1.msra.mxu0 0.0
  %1582 = vmatprep.subr.mxu0 0.0
  %1583 = vmatpush1.msra.mxu0 0.0
  %1584 = vmatprep.subr.mxu0 0.0
  %1585 = vmatpush1.msra.mxu0 0.0
  %1586 = vmatprep.subr.mxu0 0.0
  %1587 = vmatpush1.msra.mxu0 0.0
  %1588 = vmatprep.subr.mxu0 0.0
  %1589 = vmatpush1.msra.mxu0 0.0
  %1590 = vmatprep.subr.mxu0 0.0
  %1591 = vmatpush1.msra.mxu0 0.0
  %1592 = vmatprep.subr.mxu0 0.0
  %1593 = vmatpush1.msra.mxu0 0.0
  %1594 = vmatprep.subr.mxu0 0.0
  %1595 = vmatpush1.msra.mxu0 0.0
  %1596 = vmatprep.subr.mxu0 0.0
  %1597 = vmatpush1.msra.mxu0 0.0
  %1598 = vmatprep.mubr.f32.mxu0 0.0
  %1599 = vmatmul.mubr.f32.gmra.mrb[0].mxu0 %v1378
  %v1600 = vpop.f32.mrb[0].mxu0
  %v1601 = vadd.f32 0.0, %v1600
  %v1602 = vpop.f32.mrb[0].mxu0
  %v1603 = vadd.f32 0.0, %v1602
  %1604 = vdwg.mxu0
  %v1605 = vadd.f32 %v1334, %v1459
  %v1606 = vadd.f32 %v1335, %v1461
  %v1607 = vadd.f32 %v1336, %v1530
  %v1608 = vadd.f32 %v1337, %v1532
  %v1609 = vadd.f32 %v1338, %v1601
  %v1610 = vadd.f32 %v1339, %v1603
  %s1611 = scalar_lea.vmem %s1, 48
  %v1612 = vld [vmem:[%s1611] sm:$0xff]
  %s1613 = scalar_lea.vmem %s2, 48
  %v1614 = vld [vmem:[%s1613] sm:$0xff]
  %v1615 = vmul.f32 %v1612, %v1614
  %v1616 = vld [vmem:[%s0] sm:$0xff]
  %v1617 = vld [vmem:[%s0 + $0x8] sm:$0xff]
  %v1618 = vld [vmem:[%s0 + $0x10] sm:$0xff]
  %v1619 = vld [vmem:[%s0 + $0x18] sm:$0xf]
  %v1624 = vcombine.high %v1616, %v1616
  %v1625 = vcombine.high %v1617, %v1617
  %v1626 = vcombine.high %v1618, %v1618
  %1627 = vrot.lane.b32.xlu0 %v1616, 92
  %v1628 = vpop.permute.xlu0 %1627
  %1629 = vrot.lane.b32.xlu0 %v1624, 92
  %v1630 = vpop.permute.xlu0 %1629
  %1631 = vrot.lane.b32.xlu0 %v1617, 92
  %v1632 = vpop.permute.xlu0 %1631
  %1633 = vrot.lane.b32.xlu0 %v1625, 92
  %v1634 = vpop.permute.xlu0 %1633
  %1635 = vrot.lane.b32.xlu0 %v1618, 92
  %v1636 = vpop.permute.xlu0 %1635
  %1637 = vrot.lane.b32.xlu0 %v1626, 92
  %v1638 = vpop.permute.xlu0 %1637
  %1639 = vrot.lane.b32.xlu0 %v1619, 92
  %v1640 = vpop.permute.xlu0 %1639
  %vm1641 = vcmask 752640
  %v1642 = vsel %vm1641, %v1628, %v1630
  %v1643 = vsel %vm1641, %v1630, %v1632
  %v1644 = vsel %vm1641, %v1632, %v1634
  %v1645 = vsel %vm1641, %v1634, %v1636
  %v1646 = vsel %vm1641, %v1636, %v1638
  %v1647 = vsel %vm1641, %v1638, %v1640
  %v1649 = vsel %vm63, %v1615, 0
  %v1651 = vsel %vm67, %v1642, 0
  %v1653 = vsel %vm67, %v1643, 0
  %v1655 = vsel %vm67, %v1644, 0
  %v1657 = vsel %vm67, %v1645, 0
  %v1659 = vsel %vm67, %v1646, 0
  %v1661 = vsel %vm67, %v1647, 0
  %1663 = vmatprep.subr.mxu0 %v1653
  %1664 = vmatpush1.msra.mxu0 %v1651
  %1665 = vmatprep.subr.mxu0 0.0
  %1666 = vmatpush1.msra.mxu0 0.0
  %1667 = vmatprep.subr.mxu0 0.0
  %1668 = vmatpush1.msra.mxu0 0.0
  %1669 = vmatprep.subr.mxu0 0.0
  %1670 = vmatpush1.msra.mxu0 0.0
  %1671 = vmatprep.subr.mxu0 0.0
  %1672 = vmatpush1.msra.mxu0 0.0
  %1673 = vmatprep.subr.mxu0 0.0
  %1674 = vmatpush1.msra.mxu0 0.0
  %1675 = vmatprep.subr.mxu0 0.0
  %1676 = vmatpush1.msra.mxu0 0.0
  %1677 = vmatprep.subr.mxu0 0.0
  %1678 = vmatpush1.msra.mxu0 0.0
  %1679 = vmatprep.subr.mxu0 0.0
  %1680 = vmatpush1.msra.mxu0 0.0
  %1681 = vmatprep.subr.mxu0 0.0
  %1682 = vmatpush1.msra.mxu0 0.0
  %1683 = vmatprep.subr.mxu0 0.0
  %1684 = vmatpush1.msra.mxu0 0.0
  %1685 = vmatprep.subr.mxu0 0.0
  %1686 = vmatpush1.msra.mxu0 0.0
  %1687 = vmatprep.subr.mxu0 0.0
  %1688 = vmatpush1.msra.mxu0 0.0
  %1689 = vmatprep.subr.mxu0 0.0
  %1690 = vmatpush1.msra.mxu0 0.0
  %1691 = vmatprep.subr.mxu0 0.0
  %1692 = vmatpush1.msra.mxu0 0.0
  %1693 = vmatprep.subr.mxu0 0.0
  %1694 = vmatpush1.msra.mxu0 0.0
  %1695 = vmatprep.subr.mxu0 0.0
  %1696 = vmatpush1.msra.mxu0 0.0
  %1697 = vmatprep.subr.mxu0 0.0
  %1698 = vmatpush1.msra.mxu0 0.0
  %1699 = vmatprep.subr.mxu0 0.0
  %1700 = vmatpush1.msra.mxu0 0.0
  %1701 = vmatprep.subr.mxu0 0.0
  %1702 = vmatpush1.msra.mxu0 0.0
  %1703 = vmatprep.subr.mxu0 0.0
  %1704 = vmatpush1.msra.mxu0 0.0
  %1705 = vmatprep.subr.mxu0 0.0
  %1706 = vmatpush1.msra.mxu0 0.0
  %1707 = vmatprep.subr.mxu0 0.0
  %1708 = vmatpush1.msra.mxu0 0.0
  %1709 = vmatprep.subr.mxu0 0.0
  %1710 = vmatpush1.msra.mxu0 0.0
  %1711 = vmatprep.subr.mxu0 0.0
  %1712 = vmatpush1.msra.mxu0 0.0
  %1713 = vmatprep.subr.mxu0 0.0
  %1714 = vmatpush1.msra.mxu0 0.0
  %1715 = vmatprep.subr.mxu0 0.0
  %1716 = vmatpush1.msra.mxu0 0.0
  %1717 = vmatprep.subr.mxu0 0.0
  %1718 = vmatpush1.msra.mxu0 0.0
  %1719 = vmatprep.subr.mxu0 0.0
  %1720 = vmatpush1.msra.mxu0 0.0
  %1721 = vmatprep.subr.mxu0 0.0
  %1722 = vmatpush1.msra.mxu0 0.0
  %1723 = vmatprep.subr.mxu0 0.0
  %1724 = vmatpush1.msra.mxu0 0.0
  %1725 = vmatprep.subr.mxu0 0.0
  %1726 = vmatpush1.msra.mxu0 0.0
  %1727 = vmatprep.mubr.f32.mxu0 0.0
  %1728 = vmatmul.mubr.f32.gmra.mrb[0].mxu0 %v1649
  %v1729 = vpop.f32.mrb[0].mxu0
  %v1730 = vadd.f32 0.0, %v1729
  %v1731 = vpop.f32.mrb[0].mxu0
  %v1732 = vadd.f32 0.0, %v1731
  %1733 = vdwg.mxu0
  %1734 = vmatprep.subr.mxu0 %v1657
  %1735 = vmatpush1.msra.mxu0 %v1655
  %1736 = vmatprep.subr.mxu0 0.0
  %1737 = vmatpush1.msra.mxu0 0.0
  %1738 = vmatprep.subr.mxu0 0.0
  %1739 = vmatpush1.msra.mxu0 0.0
  %1740 = vmatprep.subr.mxu0 0.0
  %1741 = vmatpush1.msra.mxu0 0.0
  %1742 = vmatprep.subr.mxu0 0.0
  %1743 = vmatpush1.msra.mxu0 0.0
  %1744 = vmatprep.subr.mxu0 0.0
  %1745 = vmatpush1.msra.mxu0 0.0
  %1746 = vmatprep.subr.mxu0 0.0
  %1747 = vmatpush1.msra.mxu0 0.0
  %1748 = vmatprep.subr.mxu0 0.0
  %1749 = vmatpush1.msra.mxu0 0.0
  %1750 = vmatprep.subr.mxu0 0.0
  %1751 = vmatpush1.msra.mxu0 0.0
  %1752 = vmatprep.subr.mxu0 0.0
  %1753 = vmatpush1.msra.mxu0 0.0
  %1754 = vmatprep.subr.mxu0 0.0
  %1755 = vmatpush1.msra.mxu0 0.0
  %1756 = vmatprep.subr.mxu0 0.0
  %1757 = vmatpush1.msra.mxu0 0.0
  %1758 = vmatprep.subr.mxu0 0.0
  %1759 = vmatpush1.msra.mxu0 0.0
  %1760 = vmatprep.subr.mxu0 0.0
  %1761 = vmatpush1.msra.mxu0 0.0
  %1762 = vmatprep.subr.mxu0 0.0
  %1763 = vmatpush1.msra.mxu0 0.0
  %1764 = vmatprep.subr.mxu0 0.0
  %1765 = vmatpush1.msra.mxu0 0.0
  %1766 = vmatprep.subr.mxu0 0.0
  %1767 = vmatpush1.msra.mxu0 0.0
  %1768 = vmatprep.subr.mxu0 0.0
  %1769 = vmatpush1.msra.mxu0 0.0
  %1770 = vmatprep.subr.mxu0 0.0
  %1771 = vmatpush1.msra.mxu0 0.0
  %1772 = vmatprep.subr.mxu0 0.0
  %1773 = vmatpush1.msra.mxu0 0.0
  %1774 = vmatprep.subr.mxu0 0.0
  %1775 = vmatpush1.msra.mxu0 0.0
  %1776 = vmatprep.subr.mxu0 0.0
  %1777 = vmatpush1.msra.mxu0 0.0
  %1778 = vmatprep.subr.mxu0 0.0
  %1779 = vmatpush1.msra.mxu0 0.0
  %1780 = vmatprep.subr.mxu0 0.0
  %1781 = vmatpush1.msra.mxu0 0.0
  %1782 = vmatprep.subr.mxu0 0.0
  %1783 = vmatpush1.msra.mxu0 0.0
  %1784 = vmatprep.subr.mxu0 0.0
  %1785 = vmatpush1.msra.mxu0 0.0
  %1786 = vmatprep.subr.mxu0 0.0
  %1787 = vmatpush1.msra.mxu0 0.0
  %1788 = vmatprep.subr.mxu0 0.0
  %1789 = vmatpush1.msra.mxu0 0.0
  %1790 = vmatprep.subr.mxu0 0.0
  %1791 = vmatpush1.msra.mxu0 0.0
  %1792 = vmatprep.subr.mxu0 0.0
  %1793 = vmatpush1.msra.mxu0 0.0
  %1794 = vmatprep.subr.mxu0 0.0
  %1795 = vmatpush1.msra.mxu0 0.0
  %1796 = vmatprep.subr.mxu0 0.0
  %1797 = vmatpush1.msra.mxu0 0.0
  %1798 = vmatprep.mubr.f32.mxu0 0.0
  %1799 = vmatmul.mubr.f32.gmra.mrb[0].mxu0 %v1649
  %v1800 = vpop.f32.mrb[0].mxu0
  %v1801 = vadd.f32 0.0, %v1800
  %v1802 = vpop.f32.mrb[0].mxu0
  %v1803 = vadd.f32 0.0, %v1802
  %1804 = vdwg.mxu0
  %1805 = vmatprep.subr.mxu0 %v1661
  %1806 = vmatpush1.msra.mxu0 %v1659
  %1807 = vmatprep.subr.mxu0 0.0
  %1808 = vmatpush1.msra.mxu0 0.0
  %1809 = vmatprep.subr.mxu0 0.0
  %1810 = vmatpush1.msra.mxu0 0.0
  %1811 = vmatprep.subr.mxu0 0.0
  %1812 = vmatpush1.msra.mxu0 0.0
  %1813 = vmatprep.subr.mxu0 0.0
  %1814 = vmatpush1.msra.mxu0 0.0
  %1815 = vmatprep.subr.mxu0 0.0
  %1816 = vmatpush1.msra.mxu0 0.0
  %1817 = vmatprep.subr.mxu0 0.0
  %1818 = vmatpush1.msra.mxu0 0.0
  %1819 = vmatprep.subr.mxu0 0.0
  %1820 = vmatpush1.msra.mxu0 0.0
  %1821 = vmatprep.subr.mxu0 0.0
  %1822 = vmatpush1.msra.mxu0 0.0
  %1823 = vmatprep.subr.mxu0 0.0
  %1824 = vmatpush1.msra.mxu0 0.0
  %1825 = vmatprep.subr.mxu0 0.0
  %1826 = vmatpush1.msra.mxu0 0.0
  %1827 = vmatprep.subr.mxu0 0.0
  %1828 = vmatpush1.msra.mxu0 0.0
  %1829 = vmatprep.subr.mxu0 0.0
  %1830 = vmatpush1.msra.mxu0 0.0
  %1831 = vmatprep.subr.mxu0 0.0
  %1832 = vmatpush1.msra.mxu0 0.0
  %1833 = vmatprep.subr.mxu0 0.0
  %1834 = vmatpush1.msra.mxu0 0.0
  %1835 = vmatprep.subr.mxu0 0.0
  %1836 = vmatpush1.msra.mxu0 0.0
  %1837 = vmatprep.subr.mxu0 0.0
  %1838 = vmatpush1.msra.mxu0 0.0
  %1839 = vmatprep.subr.mxu0 0.0
  %1840 = vmatpush1.msra.mxu0 0.0
  %1841 = vmatprep.subr.mxu0 0.0
  %1842 = vmatpush1.msra.mxu0 0.0
  %1843 = vmatprep.subr.mxu0 0.0
  %1844 = vmatpush1.msra.mxu0 0.0
  %1845 = vmatprep.subr.mxu0 0.0
  %1846 = vmatpush1.msra.mxu0 0.0
  %1847 = vmatprep.subr.mxu0 0.0
  %1848 = vmatpush1.msra.mxu0 0.0
  %1849 = vmatprep.subr.mxu0 0.0
  %1850 = vmatpush1.msra.mxu0 0.0
  %1851 = vmatprep.subr.mxu0 0.0
  %1852 = vmatpush1.msra.mxu0 0.0
  %1853 = vmatprep.subr.mxu0 0.0
  %1854 = vmatpush1.msra.mxu0 0.0
  %1855 = vmatprep.subr.mxu0 0.0
  %1856 = vmatpush1.msra.mxu0 0.0
  %1857 = vmatprep.subr.mxu0 0.0
  %1858 = vmatpush1.msra.mxu0 0.0
  %1859 = vmatprep.subr.mxu0 0.0
  %1860 = vmatpush1.msra.mxu0 0.0
  %1861 = vmatprep.subr.mxu0 0.0
  %1862 = vmatpush1.msra.mxu0 0.0
  %1863 = vmatprep.subr.mxu0 0.0
  %1864 = vmatpush1.msra.mxu0 0.0
  %1865 = vmatprep.subr.mxu0 0.0
  %1866 = vmatpush1.msra.mxu0 0.0
  %1867 = vmatprep.subr.mxu0 0.0
  %1868 = vmatpush1.msra.mxu0 0.0
  %1869 = vmatprep.mubr.f32.mxu0 0.0
  %1870 = vmatmul.mubr.f32.gmra.mrb[0].mxu0 %v1649
  %v1871 = vpop.f32.mrb[0].mxu0
  %v1872 = vadd.f32 0.0, %v1871
  %v1873 = vpop.f32.mrb[0].mxu0
  %v1874 = vadd.f32 0.0, %v1873
  %1875 = vdwg.mxu0
  %v1876 = vadd.f32 %v1605, %v1730
  %v1877 = vadd.f32 %v1606, %v1732
  %v1878 = vadd.f32 %v1607, %v1801
  %v1879 = vadd.f32 %v1608, %v1803
  %v1880 = vadd.f32 %v1609, %v1872
  %v1881 = vadd.f32 %v1610, %v1874
  %s1882 = scalar_lea.vmem %s1, 56
  %v1883 = vld [vmem:[%s1882] sm:$0xff]
  %s1884 = scalar_lea.vmem %s2, 56
  %v1885 = vld [vmem:[%s1884] sm:$0xff]
  %v1886 = vmul.f32 %v1883, %v1885
  %v1887 = vld [vmem:[%s0] sm:$0xff]
  %v1888 = vld [vmem:[%s0 + $0x8] sm:$0xff]
  %v1889 = vld [vmem:[%s0 + $0x10] sm:$0xff]
  %v1890 = vld [vmem:[%s0 + $0x18] sm:$0xf]
  %v1895 = vcombine.high %v1887, %v1887
  %v1896 = vcombine.high %v1888, %v1888
  %v1897 = vcombine.high %v1889, %v1889
  %1898 = vrot.lane.b32.xlu0 %v1887, 91
  %v1899 = vpop.permute.xlu0 %1898
  %1900 = vrot.lane.b32.xlu0 %v1895, 91
  %v1901 = vpop.permute.xlu0 %1900
  %1902 = vrot.lane.b32.xlu0 %v1888, 91
  %v1903 = vpop.permute.xlu0 %1902
  %1904 = vrot.lane.b32.xlu0 %v1896, 91
  %v1905 = vpop.permute.xlu0 %1904
  %1906 = vrot.lane.b32.xlu0 %v1889, 91
  %v1907 = vpop.permute.xlu0 %1906
  %1908 = vrot.lane.b32.xlu0 %v1897, 91
  %v1909 = vpop.permute.xlu0 %1908
  %1910 = vrot.lane.b32.xlu0 %v1890, 91
  %v1911 = vpop.permute.xlu0 %1910
  %vm1912 = vcmask 744448
  %v1913 = vsel %vm1912, %v1899, %v1901
  %v1914 = vsel %vm1912, %v1901, %v1903
  %v1915 = vsel %vm1912, %v1903, %v1905
  %v1916 = vsel %vm1912, %v1905, %v1907
  %v1917 = vsel %vm1912, %v1907, %v1909
  %v1918 = vsel %vm1912, %v1909, %v1911
  %v1920 = vsel %vm63, %v1886, 0
  %v1922 = vsel %vm67, %v1913, 0
  %v1924 = vsel %vm67, %v1914, 0
  %v1926 = vsel %vm67, %v1915, 0
  %v1928 = vsel %vm67, %v1916, 0
  %v1930 = vsel %vm67, %v1917, 0
  %v1932 = vsel %vm67, %v1918, 0
  %1934 = vmatprep.subr.mxu0 %v1924
  %1935 = vmatpush1.msra.mxu0 %v1922
  %1936 = vmatprep.subr.mxu0 0.0
  %1937 = vmatpush1.msra.mxu0 0.0
  %1938 = vmatprep.subr.mxu0 0.0
  %1939 = vmatpush1.msra.mxu0 0.0
  %1940 = vmatprep.subr.mxu0 0.0
  %1941 = vmatpush1.msra.mxu0 0.0
  %1942 = vmatprep.subr.mxu0 0.0
  %1943 = vmatpush1.msra.mxu0 0.0
  %1944 = vmatprep.subr.mxu0 0.0
  %1945 = vmatpush1.msra.mxu0 0.0
  %1946 = vmatprep.subr.mxu0 0.0
  %1947 = vmatpush1.msra.mxu0 0.0
  %1948 = vmatprep.subr.mxu0 0.0
  %1949 = vmatpush1.msra.mxu0 0.0
  %1950 = vmatprep.subr.mxu0 0.0
  %1951 = vmatpush1.msra.mxu0 0.0
  %1952 = vmatprep.subr.mxu0 0.0
  %1953 = vmatpush1.msra.mxu0 0.0
  %1954 = vmatprep.subr.mxu0 0.0
  %1955 = vmatpush1.msra.mxu0 0.0
  %1956 = vmatprep.subr.mxu0 0.0
  %1957 = vmatpush1.msra.mxu0 0.0
  %1958 = vmatprep.subr.mxu0 0.0
  %1959 = vmatpush1.msra.mxu0 0.0
  %1960 = vmatprep.subr.mxu0 0.0
  %1961 = vmatpush1.msra.mxu0 0.0
  %1962 = vmatprep.subr.mxu0 0.0
  %1963 = vmatpush1.msra.mxu0 0.0
  %1964 = vmatprep.subr.mxu0 0.0
  %1965 = vmatpush1.msra.mxu0 0.0
  %1966 = vmatprep.subr.mxu0 0.0
  %1967 = vmatpush1.msra.mxu0 0.0
  %1968 = vmatprep.subr.mxu0 0.0
  %1969 = vmatpush1.msra.mxu0 0.0
  %1970 = vmatprep.subr.mxu0 0.0
  %1971 = vmatpush1.msra.mxu0 0.0
  %1972 = vmatprep.subr.mxu0 0.0
  %1973 = vmatpush1.msra.mxu0 0.0
  %1974 = vmatprep.subr.mxu0 0.0
  %1975 = vmatpush1.msra.mxu0 0.0
  %1976 = vmatprep.subr.mxu0 0.0
  %1977 = vmatpush1.msra.mxu0 0.0
  %1978 = vmatprep.subr.mxu0 0.0
  %1979 = vmatpush1.msra.mxu0 0.0
  %1980 = vmatprep.subr.mxu0 0.0
  %1981 = vmatpush1.msra.mxu0 0.0
  %1982 = vmatprep.subr.mxu0 0.0
  %1983 = vmatpush1.msra.mxu0 0.0
  %1984 = vmatprep.subr.mxu0 0.0
  %1985 = vmatpush1.msra.mxu0 0.0
  %1986 = vmatprep.subr.mxu0 0.0
  %1987 = vmatpush1.msra.mxu0 0.0
  %1988 = vmatprep.subr.mxu0 0.0
  %1989 = vmatpush1.msra.mxu0 0.0
  %1990 = vmatprep.subr.mxu0 0.0
  %1991 = vmatpush1.msra.mxu0 0.0
  %1992 = vmatprep.subr.mxu0 0.0
  %1993 = vmatpush1.msra.mxu0 0.0
  %1994 = vmatprep.subr.mxu0 0.0
  %1995 = vmatpush1.msra.mxu0 0.0
  %1996 = vmatprep.subr.mxu0 0.0
  %1997 = vmatpush1.msra.mxu0 0.0
  %1998 = vmatprep.mubr.f32.mxu0 0.0
  %1999 = vmatmul.mubr.f32.gmra.mrb[0].mxu0 %v1920
  %v2000 = vpop.f32.mrb[0].mxu0
  %v2001 = vadd.f32 0.0, %v2000
  %v2002 = vpop.f32.mrb[0].mxu0
  %v2003 = vadd.f32 0.0, %v2002
  %2004 = vdwg.mxu0
  %2005 = vmatprep.subr.mxu0 %v1928
  %2006 = vmatpush1.msra.mxu0 %v1926
  %2007 = vmatprep.subr.mxu0 0.0
  %2008 = vmatpush1.msra.mxu0 0.0
  %2009 = vmatprep.subr.mxu0 0.0
  %2010 = vmatpush1.msra.mxu0 0.0
  %2011 = vmatprep.subr.mxu0 0.0
  %2012 = vmatpush1.msra.mxu0 0.0
  %2013 = vmatprep.subr.mxu0 0.0
  %2014 = vmatpush1.msra.mxu0 0.0
  %2015 = vmatprep.subr.mxu0 0.0
  %2016 = vmatpush1.msra.mxu0 0.0
  %2017 = vmatprep.subr.mxu0 0.0
  %2018 = vmatpush1.msra.mxu0 0.0
  %2019 = vmatprep.subr.mxu0 0.0
  %2020 = vmatpush1.msra.mxu0 0.0
  %2021 = vmatprep.subr.mxu0 0.0
  %2022 = vmatpush1.msra.mxu0 0.0
  %2023 = vmatprep.subr.mxu0 0.0
  %2024 = vmatpush1.msra.mxu0 0.0
  %2025 = vmatprep.subr.mxu0 0.0
  %2026 = vmatpush1.msra.mxu0 0.0
  %2027 = vmatprep.subr.mxu0 0.0
  %2028 = vmatpush1.msra.mxu0 0.0
  %2029 = vmatprep.subr.mxu0 0.0
  %2030 = vmatpush1.msra.mxu0 0.0
  %2031 = vmatprep.subr.mxu0 0.0
  %2032 = vmatpush1.msra.mxu0 0.0
  %2033 = vmatprep.subr.mxu0 0.0
  %2034 = vmatpush1.msra.mxu0 0.0
  %2035 = vmatprep.subr.mxu0 0.0
  %2036 = vmatpush1.msra.mxu0 0.0
  %2037 = vmatprep.subr.mxu0 0.0
  %2038 = vmatpush1.msra.mxu0 0.0
  %2039 = vmatprep.subr.mxu0 0.0
  %2040 = vmatpush1.msra.mxu0 0.0
  %2041 = vmatprep.subr.mxu0 0.0
  %2042 = vmatpush1.msra.mxu0 0.0
  %2043 = vmatprep.subr.mxu0 0.0
  %2044 = vmatpush1.msra.mxu0 0.0
  %2045 = vmatprep.subr.mxu0 0.0
  %2046 = vmatpush1.msra.mxu0 0.0
  %2047 = vmatprep.subr.mxu0 0.0
  %2048 = vmatpush1.msra.mxu0 0.0
  %2049 = vmatprep.subr.mxu0 0.0
  %2050 = vmatpush1.msra.mxu0 0.0
  %2051 = vmatprep.subr.mxu0 0.0
  %2052 = vmatpush1.msra.mxu0 0.0
  %2053 = vmatprep.subr.mxu0 0.0
  %2054 = vmatpush1.msra.mxu0 0.0
  %2055 = vmatprep.subr.mxu0 0.0
  %2056 = vmatpush1.msra.mxu0 0.0
  %2057 = vmatprep.subr.mxu0 0.0
  %2058 = vmatpush1.msra.mxu0 0.0
  %2059 = vmatprep.subr.mxu0 0.0
  %2060 = vmatpush1.msra.mxu0 0.0
  %2061 = vmatprep.subr.mxu0 0.0
  %2062 = vmatpush1.msra.mxu0 0.0
  %2063 = vmatprep.subr.mxu0 0.0
  %2064 = vmatpush1.msra.mxu0 0.0
  %2065 = vmatprep.subr.mxu0 0.0
  %2066 = vmatpush1.msra.mxu0 0.0
  %2067 = vmatprep.subr.mxu0 0.0
  %2068 = vmatpush1.msra.mxu0 0.0
  %2069 = vmatprep.mubr.f32.mxu0 0.0
  %2070 = vmatmul.mubr.f32.gmra.mrb[0].mxu0 %v1920
  %v2071 = vpop.f32.mrb[0].mxu0
  %v2072 = vadd.f32 0.0, %v2071
  %v2073 = vpop.f32.mrb[0].mxu0
  %v2074 = vadd.f32 0.0, %v2073
  %2075 = vdwg.mxu0
  %2076 = vmatprep.subr.mxu0 %v1932
  %2077 = vmatpush1.msra.mxu0 %v1930
  %2078 = vmatprep.subr.mxu0 0.0
  %2079 = vmatpush1.msra.mxu0 0.0
  %2080 = vmatprep.subr.mxu0 0.0
  %2081 = vmatpush1.msra.mxu0 0.0
  %2082 = vmatprep.subr.mxu0 0.0
  %2083 = vmatpush1.msra.mxu0 0.0
  %2084 = vmatprep.subr.mxu0 0.0
  %2085 = vmatpush1.msra.mxu0 0.0
  %2086 = vmatprep.subr.mxu0 0.0
  %2087 = vmatpush1.msra.mxu0 0.0
  %2088 = vmatprep.subr.mxu0 0.0
  %2089 = vmatpush1.msra.mxu0 0.0
  %2090 = vmatprep.subr.mxu0 0.0
  %2091 = vmatpush1.msra.mxu0 0.0
  %2092 = vmatprep.subr.mxu0 0.0
  %2093 = vmatpush1.msra.mxu0 0.0
  %2094 = vmatprep.subr.mxu0 0.0
  %2095 = vmatpush1.msra.mxu0 0.0
  %2096 = vmatprep.subr.mxu0 0.0
  %2097 = vmatpush1.msra.mxu0 0.0
  %2098 = vmatprep.subr.mxu0 0.0
  %2099 = vmatpush1.msra.mxu0 0.0
  %2100 = vmatprep.subr.mxu0 0.0
  %2101 = vmatpush1.msra.mxu0 0.0
  %2102 = vmatprep.subr.mxu0 0.0
  %2103 = vmatpush1.msra.mxu0 0.0
  %2104 = vmatprep.subr.mxu0 0.0
  %2105 = vmatpush1.msra.mxu0 0.0
  %2106 = vmatprep.subr.mxu0 0.0
  %2107 = vmatpush1.msra.mxu0 0.0
  %2108 = vmatprep.subr.mxu0 0.0
  %2109 = vmatpush1.msra.mxu0 0.0
  %2110 = vmatprep.subr.mxu0 0.0
  %2111 = vmatpush1.msra.mxu0 0.0
  %2112 = vmatprep.subr.mxu0 0.0
  %2113 = vmatpush1.msra.mxu0 0.0
  %2114 = vmatprep.subr.mxu0 0.0
  %2115 = vmatpush1.msra.mxu0 0.0
  %2116 = vmatprep.subr.mxu0 0.0
  %2117 = vmatpush1.msra.mxu0 0.0
  %2118 = vmatprep.subr.mxu0 0.0
  %2119 = vmatpush1.msra.mxu0 0.0
  %2120 = vmatprep.subr.mxu0 0.0
  %2121 = vmatpush1.msra.mxu0 0.0
  %2122 = vmatprep.subr.mxu0 0.0
  %2123 = vmatpush1.msra.mxu0 0.0
  %2124 = vmatprep.subr.mxu0 0.0
  %2125 = vmatpush1.msra.mxu0 0.0
  %2126 = vmatprep.subr.mxu0 0.0
  %2127 = vmatpush1.msra.mxu0 0.0
  %2128 = vmatprep.subr.mxu0 0.0
  %2129 = vmatpush1.msra.mxu0 0.0
  %2130 = vmatprep.subr.mxu0 0.0
  %2131 = vmatpush1.msra.mxu0 0.0
  %2132 = vmatprep.subr.mxu0 0.0
  %2133 = vmatpush1.msra.mxu0 0.0
  %2134 = vmatprep.subr.mxu0 0.0
  %2135 = vmatpush1.msra.mxu0 0.0
  %2136 = vmatprep.subr.mxu0 0.0
  %2137 = vmatpush1.msra.mxu0 0.0
  %2138 = vmatprep.subr.mxu0 0.0
  %2139 = vmatpush1.msra.mxu0 0.0
  %2140 = vmatprep.mubr.f32.mxu0 0.0
  %2141 = vmatmul.mubr.f32.gmra.mrb[0].mxu0 %v1920
  %v2142 = vpop.f32.mrb[0].mxu0
  %v2143 = vadd.f32 0.0, %v2142
  %v2144 = vpop.f32.mrb[0].mxu0
  %v2145 = vadd.f32 0.0, %v2144
  %2146 = vdwg.mxu0
  %v2147 = vadd.f32 %v1876, %v2001
  %v2148 = vadd.f32 %v1877, %v2003
  %v2149 = vadd.f32 %v1878, %v2072
  %v2150 = vadd.f32 %v1879, %v2074
  %v2151 = vadd.f32 %v1880, %v2143
  %v2152 = vadd.f32 %v1881, %v2145
  %s2153 = scalar_lea.vmem %s1, 64
  %v2154 = vld [vmem:[%s2153] sm:$0xff]
  %s2155 = scalar_lea.vmem %s2, 64
  %v2156 = vld [vmem:[%s2155] sm:$0xff]
  %v2157 = vmul.f32 %v2154, %v2156
  %v2158 = vld [vmem:[%s0] sm:$0xff]
  %v2159 = vld [vmem:[%s0 + $0x8] sm:$0xff]
  %v2160 = vld [vmem:[%s0 + $0x10] sm:$0xff]
  %v2161 = vld [vmem:[%s0 + $0x18] sm:$0xf]
  %v2166 = vcombine.high %v2158, %v2158
  %v2167 = vcombine.high %v2159, %v2159
  %v2168 = vcombine.high %v2160, %v2160
  %2169 = vrot.lane.b32.xlu0 %v2158, 90
  %v2170 = vpop.permute.xlu0 %2169
  %2171 = vrot.lane.b32.xlu0 %v2166, 90
  %v2172 = vpop.permute.xlu0 %2171
  %2173 = vrot.lane.b32.xlu0 %v2159, 90
  %v2174 = vpop.permute.xlu0 %2173
  %2175 = vrot.lane.b32.xlu0 %v2167, 90
  %v2176 = vpop.permute.xlu0 %2175
  %2177 = vrot.lane.b32.xlu0 %v2160, 90
  %v2178 = vpop.permute.xlu0 %2177
  %2179 = vrot.lane.b32.xlu0 %v2168, 90
  %v2180 = vpop.permute.xlu0 %2179
  %2181 = vrot.lane.b32.xlu0 %v2161, 90
  %v2182 = vpop.permute.xlu0 %2181
  %vm2183 = vcmask 736256
  %v2184 = vsel %vm2183, %v2170, %v2172
  %v2185 = vsel %vm2183, %v2172, %v2174
  %v2186 = vsel %vm2183, %v2174, %v2176
  %v2187 = vsel %vm2183, %v2176, %v2178
  %v2188 = vsel %vm2183, %v2178, %v2180
  %v2189 = vsel %vm2183, %v2180, %v2182
  %v2191 = vsel %vm63, %v2157, 0
  %v2193 = vsel %vm67, %v2184, 0
  %v2195 = vsel %vm67, %v2185, 0
  %v2197 = vsel %vm67, %v2186, 0
  %v2199 = vsel %vm67, %v2187, 0
  %v2201 = vsel %vm67, %v2188, 0
  %v2203 = vsel %vm67, %v2189, 0
  %2205 = vmatprep.subr.mxu0 %v2195
  %2206 = vmatpush1.msra.mxu0 %v2193
  %2207 = vmatprep.subr.mxu0 0.0
  %2208 = vmatpush1.msra.mxu0 0.0
  %2209 = vmatprep.subr.mxu0 0.0
  %2210 = vmatpush1.msra.mxu0 0.0
  %2211 = vmatprep.subr.mxu0 0.0
  %2212 = vmatpush1.msra.mxu0 0.0
  %2213 = vmatprep.subr.mxu0 0.0
  %2214 = vmatpush1.msra.mxu0 0.0
  %2215 = vmatprep.subr.mxu0 0.0
  %2216 = vmatpush1.msra.mxu0 0.0
  %2217 = vmatprep.subr.mxu0 0.0
  %2218 = vmatpush1.msra.mxu0 0.0
  %2219 = vmatprep.subr.mxu0 0.0
  %2220 = vmatpush1.msra.mxu0 0.0
  %2221 = vmatprep.subr.mxu0 0.0
  %2222 = vmatpush1.msra.mxu0 0.0
  %2223 = vmatprep.subr.mxu0 0.0
  %2224 = vmatpush1.msra.mxu0 0.0
  %2225 = vmatprep.subr.mxu0 0.0
  %2226 = vmatpush1.msra.mxu0 0.0
  %2227 = vmatprep.subr.mxu0 0.0
  %2228 = vmatpush1.msra.mxu0 0.0
  %2229 = vmatprep.subr.mxu0 0.0
  %2230 = vmatpush1.msra.mxu0 0.0
  %2231 = vmatprep.subr.mxu0 0.0
  %2232 = vmatpush1.msra.mxu0 0.0
  %2233 = vmatprep.subr.mxu0 0.0
  %2234 = vmatpush1.msra.mxu0 0.0
  %2235 = vmatprep.subr.mxu0 0.0
  %2236 = vmatpush1.msra.mxu0 0.0
  %2237 = vmatprep.subr.mxu0 0.0
  %2238 = vmatpush1.msra.mxu0 0.0
  %2239 = vmatprep.subr.mxu0 0.0
  %2240 = vmatpush1.msra.mxu0 0.0
  %2241 = vmatprep.subr.mxu0 0.0
  %2242 = vmatpush1.msra.mxu0 0.0
  %2243 = vmatprep.subr.mxu0 0.0
  %2244 = vmatpush1.msra.mxu0 0.0
  %2245 = vmatprep.subr.mxu0 0.0
  %2246 = vmatpush1.msra.mxu0 0.0
  %2247 = vmatprep.subr.mxu0 0.0
  %2248 = vmatpush1.msra.mxu0 0.0
  %2249 = vmatprep.subr.mxu0 0.0
  %2250 = vmatpush1.msra.mxu0 0.0
  %2251 = vmatprep.subr.mxu0 0.0
  %2252 = vmatpush1.msra.mxu0 0.0
  %2253 = vmatprep.subr.mxu0 0.0
  %2254 = vmatpush1.msra.mxu0 0.0
  %2255 = vmatprep.subr.mxu0 0.0
  %2256 = vmatpush1.msra.mxu0 0.0
  %2257 = vmatprep.subr.mxu0 0.0
  %2258 = vmatpush1.msra.mxu0 0.0
  %2259 = vmatprep.subr.mxu0 0.0
  %2260 = vmatpush1.msra.mxu0 0.0
  %2261 = vmatprep.subr.mxu0 0.0
  %2262 = vmatpush1.msra.mxu0 0.0
  %2263 = vmatprep.subr.mxu0 0.0
  %2264 = vmatpush1.msra.mxu0 0.0
  %2265 = vmatprep.subr.mxu0 0.0
  %2266 = vmatpush1.msra.mxu0 0.0
  %2267 = vmatprep.subr.mxu0 0.0
  %2268 = vmatpush1.msra.mxu0 0.0
  %2269 = vmatprep.mubr.f32.mxu0 0.0
  %2270 = vmatmul.mubr.f32.gmra.mrb[0].mxu0 %v2191
  %v2271 = vpop.f32.mrb[0].mxu0
  %v2272 = vadd.f32 0.0, %v2271
  %v2273 = vpop.f32.mrb[0].mxu0
  %v2274 = vadd.f32 0.0, %v2273
  %2275 = vdwg.mxu0
  %2276 = vmatprep.subr.mxu0 %v2199
  %2277 = vmatpush1.msra.mxu0 %v2197
  %2278 = vmatprep.subr.mxu0 0.0
  %2279 = vmatpush1.msra.mxu0 0.0
  %2280 = vmatprep.subr.mxu0 0.0
  %2281 = vmatpush1.msra.mxu0 0.0
  %2282 = vmatprep.subr.mxu0 0.0
  %2283 = vmatpush1.msra.mxu0 0.0
  %2284 = vmatprep.subr.mxu0 0.0
  %2285 = vmatpush1.msra.mxu0 0.0
  %2286 = vmatprep.subr.mxu0 0.0
  %2287 = vmatpush1.msra.mxu0 0.0
  %2288 = vmatprep.subr.mxu0 0.0
  %2289 = vmatpush1.msra.mxu0 0.0
  %2290 = vmatprep.subr.mxu0 0.0
  %2291 = vmatpush1.msra.mxu0 0.0
  %2292 = vmatprep.subr.mxu0 0.0
  %2293 = vmatpush1.msra.mxu0 0.0
  %2294 = vmatprep.subr.mxu0 0.0
  %2295 = vmatpush1.msra.mxu0 0.0
  %2296 = vmatprep.subr.mxu0 0.0
  %2297 = vmatpush1.msra.mxu0 0.0
  %2298 = vmatprep.subr.mxu0 0.0
  %2299 = vmatpush1.msra.mxu0 0.0
  %2300 = vmatprep.subr.mxu0 0.0
  %2301 = vmatpush1.msra.mxu0 0.0
  %2302 = vmatprep.subr.mxu0 0.0
  %2303 = vmatpush1.msra.mxu0 0.0
  %2304 = vmatprep.subr.mxu0 0.0
  %2305 = vmatpush1.msra.mxu0 0.0
  %2306 = vmatprep.subr.mxu0 0.0
  %2307 = vmatpush1.msra.mxu0 0.0
  %2308 = vmatprep.subr.mxu0 0.0
  %2309 = vmatpush1.msra.mxu0 0.0
  %2310 = vmatprep.subr.mxu0 0.0
  %2311 = vmatpush1.msra.mxu0 0.0
  %2312 = vmatprep.subr.mxu0 0.0
  %2313 = vmatpush1.msra.mxu0 0.0
  %2314 = vmatprep.subr.mxu0 0.0
  %2315 = vmatpush1.msra.mxu0 0.0
  %2316 = vmatprep.subr.mxu0 0.0
  %2317 = vmatpush1.msra.mxu0 0.0
  %2318 = vmatprep.subr.mxu0 0.0
  %2319 = vmatpush1.msra.mxu0 0.0
  %2320 = vmatprep.subr.mxu0 0.0
  %2321 = vmatpush1.msra.mxu0 0.0
  %2322 = vmatprep.subr.mxu0 0.0
  %2323 = vmatpush1.msra.mxu0 0.0
  %2324 = vmatprep.subr.mxu0 0.0
  %2325 = vmatpush1.msra.mxu0 0.0
  %2326 = vmatprep.subr.mxu0 0.0
  %2327 = vmatpush1.msra.mxu0 0.0
  %2328 = vmatprep.subr.mxu0 0.0
  %2329 = vmatpush1.msra.mxu0 0.0
  %2330 = vmatprep.subr.mxu0 0.0
  %2331 = vmatpush1.msra.mxu0 0.0
  %2332 = vmatprep.subr.mxu0 0.0
  %2333 = vmatpush1.msra.mxu0 0.0
  %2334 = vmatprep.subr.mxu0 0.0
  %2335 = vmatpush1.msra.mxu0 0.0
  %2336 = vmatprep.subr.mxu0 0.0
  %2337 = vmatpush1.msra.mxu0 0.0
  %2338 = vmatprep.subr.mxu0 0.0
  %2339 = vmatpush1.msra.mxu0 0.0
  %2340 = vmatprep.mubr.f32.mxu0 0.0
  %2341 = vmatmul.mubr.f32.gmra.mrb[0].mxu0 %v2191
  %v2342 = vpop.f32.mrb[0].mxu0
  %v2343 = vadd.f32 0.0, %v2342
  %v2344 = vpop.f32.mrb[0].mxu0
  %v2345 = vadd.f32 0.0, %v2344
  %2346 = vdwg.mxu0
  %2347 = vmatprep.subr.mxu0 %v2203
  %2348 = vmatpush1.msra.mxu0 %v2201
  %2349 = vmatprep.subr.mxu0 0.0
  %2350 = vmatpush1.msra.mxu0 0.0
  %2351 = vmatprep.subr.mxu0 0.0
  %2352 = vmatpush1.msra.mxu0 0.0
  %2353 = vmatprep.subr.mxu0 0.0
  %2354 = vmatpush1.msra.mxu0 0.0
  %2355 = vmatprep.subr.mxu0 0.0
  %2356 = vmatpush1.msra.mxu0 0.0
  %2357 = vmatprep.subr.mxu0 0.0
  %2358 = vmatpush1.msra.mxu0 0.0
  %2359 = vmatprep.subr.mxu0 0.0
  %2360 = vmatpush1.msra.mxu0 0.0
  %2361 = vmatprep.subr.mxu0 0.0
  %2362 = vmatpush1.msra.mxu0 0.0
  %2363 = vmatprep.subr.mxu0 0.0
  %2364 = vmatpush1.msra.mxu0 0.0
  %2365 = vmatprep.subr.mxu0 0.0
  %2366 = vmatpush1.msra.mxu0 0.0
  %2367 = vmatprep.subr.mxu0 0.0
  %2368 = vmatpush1.msra.mxu0 0.0
  %2369 = vmatprep.subr.mxu0 0.0
  %2370 = vmatpush1.msra.mxu0 0.0
  %2371 = vmatprep.subr.mxu0 0.0
  %2372 = vmatpush1.msra.mxu0 0.0
  %2373 = vmatprep.subr.mxu0 0.0
  %2374 = vmatpush1.msra.mxu0 0.0
  %2375 = vmatprep.subr.mxu0 0.0
  %2376 = vmatpush1.msra.mxu0 0.0
  %2377 = vmatprep.subr.mxu0 0.0
  %2378 = vmatpush1.msra.mxu0 0.0
  %2379 = vmatprep.subr.mxu0 0.0
  %2380 = vmatpush1.msra.mxu0 0.0
  %2381 = vmatprep.subr.mxu0 0.0
  %2382 = vmatpush1.msra.mxu0 0.0
  %2383 = vmatprep.subr.mxu0 0.0
  %2384 = vmatpush1.msra.mxu0 0.0
  %2385 = vmatprep.subr.mxu0 0.0
  %2386 = vmatpush1.msra.mxu0 0.0
  %2387 = vmatprep.subr.mxu0 0.0
  %2388 = vmatpush1.msra.mxu0 0.0
  %2389 = vmatprep.subr.mxu0 0.0
  %2390 = vmatpush1.msra.mxu0 0.0
  %2391 = vmatprep.subr.mxu0 0.0
  %2392 = vmatpush1.msra.mxu0 0.0
  %2393 = vmatprep.subr.mxu0 0.0
  %2394 = vmatpush1.msra.mxu0 0.0
  %2395 = vmatprep.subr.mxu0 0.0
  %2396 = vmatpush1.msra.mxu0 0.0
  %2397 = vmatprep.subr.mxu0 0.0
  %2398 = vmatpush1.msra.mxu0 0.0
  %2399 = vmatprep.subr.mxu0 0.0
  %2400 = vmatpush1.msra.mxu0 0.0
  %2401 = vmatprep.subr.mxu0 0.0
  %2402 = vmatpush1.msra.mxu0 0.0
  %2403 = vmatprep.subr.mxu0 0.0
  %2404 = vmatpush1.msra.mxu0 0.0
  %2405 = vmatprep.subr.mxu0 0.0
  %2406 = vmatpush1.msra.mxu0 0.0
  %2407 = vmatprep.subr.mxu0 0.0
  %2408 = vmatpush1.msra.mxu0 0.0
  %2409 = vmatprep.subr.mxu0 0.0
  %2410 = vmatpush1.msra.mxu0 0.0
  %2411 = vmatprep.mubr.f32.mxu0 0.0
  %2412 = vmatmul.mubr.f32.gmra.mrb[0].mxu0 %v2191
  %v2413 = vpop.f32.mrb[0].mxu0
  %v2414 = vadd.f32 0.0, %v2413
  %v2415 = vpop.f32.mrb[0].mxu0
  %v2416 = vadd.f32 0.0, %v2415
  %2417 = vdwg.mxu0
  %v2418 = vadd.f32 %v2147, %v2272
  %v2419 = vadd.f32 %v2148, %v2274
  %v2420 = vadd.f32 %v2149, %v2343
  %v2421 = vadd.f32 %v2150, %v2345
  %v2422 = vadd.f32 %v2151, %v2414
  %v2423 = vadd.f32 %v2152, %v2416
  %v2424 = vld [vmem:[%s3] sm:$0xff]
  %v2425 = vld [vmem:[%s4] sm:$0xff]
  %v2426 = vmul.f32 %v2424, %v2425
  %2428 = vset.pattern.permute.xlu0 0
  %2429 = vperm.xlu0 %2428, %v2426
  %v2430 = vpop.permute.xlu0 %2429
  %v2432 = vadd.f32 %v2418, %v2430
  %v2433 = vadd.f32 %v2419, %v2430
  %v2434 = vadd.f32 %v2420, %v2430
  %v2435 = vadd.f32 %v2421, %v2430
  %v2436 = vadd.f32 %v2422, %v2430
  %v2437 = vadd.f32 %v2423, %v2430
  %2438 = vst [vmem:[%s5] sm:$0xff] %v2432
  %2439 = vst [vmem:[%s5 + $0x8] sm:$0xff] %v2433
  %2440 = vst [vmem:[%s5 + $0x10] sm:$0xff] %v2434
  %2441 = vst [vmem:[%s5 + $0x18] sm:$0xff] %v2435
  %2442 = vst [vmem:[%s5 + $0x20] sm:$0xff] %v2436
  %2443 = vst [vmem:[%s5 + $0x28] sm:$0xff] %v2437
  // Predicated region
  $region22: #{pruner_wrapped_conv2d.1} parent=0 // pred_check
    _
  $region23: #{pruner_wrapped_conv2d.1} parent=0 // pred_check_branch
    %2445 = sbr.rel (0) target = $region25
  $region24: #{pruner_wrapped_conv2d.1} parent=0 // pred_region
    _
  $region25: #{pruner_wrapped_conv2d.1} parent=0 // pred_fallthru
    _
  // Predicated region
  $region26: #{pruner_wrapped_conv2d.1} parent=0 // pred_check
    _
  $region27: #{pruner_wrapped_conv2d.1} parent=0 // pred_check_branch
    %2447 = sbr.rel (0) target = $region29
  $region28: #{pruner_wrapped_conv2d.1} parent=0 // pred_region
    _
  $region29: #{pruner_wrapped_conv2d.1} parent=0 // pred_fallthru
    _

</llo_original>
